<compile_context>
chip_gen: v5e
topology: v5e:2x2
jax: 0.10.0
libtpu: 0.0.40
codegen_flags: <defaults>
</compile_context>

<pallas_src>
import functools
import math

import jax
import jax.numpy as jnp
from jax.experimental import pallas as pl


C_PAD = 128  # lane-dense padded class dimension for the output head


# ------------------------------ fused kernel -------------------------------

def _fused_forward_kernel(
    emb_ref, pe_ref, w_in_ref,
    w_qkv_ref, b_qkv_ref, w_o_ref,
    w_ff1_ref, b_ff1_ref, w_ff2_ref,
    small_ref,                       # [L, 6, D]: b_o, ln1_g, ln1_b, b_ff2, ln2_g, ln2_b
    w_out_ref, b_out_ref,
    out_ref,
    *, num_layers, batch, seq, d_model, head, eps):
    dh = d_model // head
    rows = batch * seq
    scale = 1.0 / math.sqrt(dh)

    def layernorm(y, gamma, beta):
        mean = jnp.mean(y, axis=-1, keepdims=True)
        var = jnp.mean((y - mean) ** 2, axis=-1, keepdims=True)
        return (y - mean) * jax.lax.rsqrt(var + eps) * gamma + beta

    # Block-diagonal attention mask (rows are seq-major: row i is batch i % B).
    # Computed once, reused by every layer/head.
    row_b = jax.lax.broadcasted_iota(jnp.int32, (rows, rows), 0) % batch
    col_b = jax.lax.broadcasted_iota(jnp.int32, (rows, rows), 1) % batch
    neg = jnp.where(row_b == col_b, 0.0, -1e30).astype(jnp.float32)

    # ---- input projection + positional encoding (b_in folded into pe) ----
    x = jnp.dot(emb_ref[...], w_in_ref[...],
                preferred_element_type=jnp.float32) + pe_ref[...]   # [B*S, D]

    # ---- transformer encoder layers (post-norm, ReLU, PyTorch defaults) ----
    for l in range(num_layers):
        sp = small_ref[l]                                      # [6, D]

        # Fused QKV: one [B*S, D] x [D, 3D] matmul; heads are lane slices.
        qkv = jnp.dot(x, w_qkv_ref[l],
                      preferred_element_type=jnp.float32) + b_qkv_ref[l]

        head_outs = []
        for h in range(head):
            q = qkv[:, h * dh:(h + 1) * dh]                    # [B*S, dh]
            k = qkv[:, d_model + h * dh:d_model + (h + 1) * dh]
            v = qkv[:, 2 * d_model + h * dh:2 * d_model + (h + 1) * dh]
            s = jax.lax.dot_general(                           # q @ k^T (nt form)
                q, k, (((1,), (1,)), ((), ())),
                preferred_element_type=jnp.float32) * scale + neg
            m = jnp.max(s, axis=-1, keepdims=True)
            p = jnp.exp(s - m)
            p = p * pl.reciprocal(jnp.sum(p, axis=-1, keepdims=True), approx=True)
            head_outs.append(jnp.dot(p, v, preferred_element_type=jnp.float32))

        o = jnp.concatenate(head_outs, axis=-1)                # [B*S, D]
        attn = jnp.dot(o, w_o_ref[l],
                       preferred_element_type=jnp.float32) + sp[0:1, :]
        x = layernorm(x + attn, sp[1:2, :], sp[2:3, :])

        # Feed-forward (Linear -> ReLU -> Linear) + residual + LN.
        hidden = jnp.maximum(
            jnp.dot(x, w_ff1_ref[l],
                    preferred_element_type=jnp.float32) + b_ff1_ref[l], 0.0)
        ff = jnp.dot(hidden, w_ff2_ref[l],
                     preferred_element_type=jnp.float32) + sp[3:4, :]
        x = layernorm(x + ff, sp[4:5, :], sp[5:6, :])

    # ---- permute->flatten + output linear + log-softmax -------------------
    # Seq-major rows make each per-s slab contiguous:
    #   logits[b, :] = b_out + sum_s x[s*B + b, :] @ w_out[s]
    acc = jnp.zeros((batch, C_PAD), jnp.float32)
    for s_i in range(seq):
        xb = x[s_i * batch:(s_i + 1) * batch, :]               # [B, D]
        acc = acc + jnp.dot(xb, w_out_ref[s_i],
                            preferred_element_type=jnp.float32)
    logits = acc + b_out_ref[...]                              # [B, C_PAD]

    m = jnp.max(logits, axis=-1, keepdims=True)
    sh = logits - m
    out_ref[...] = sh - jnp.log(jnp.sum(jnp.exp(sh), axis=-1, keepdims=True))


# ----------------------------- parameter setup -----------------------------

def init_params(key, vocab, emb_dim, d_model, head, dim_ff, num_layers,
                maxlen, n_classes):
    """Random params, stored directly in fused, kernel-ready slabs."""
    keys = jax.random.split(key, 3 + num_layers)

    def dense(k, in_dim, out_dim):
        kw, kb = jax.random.split(k)
        w = jax.random.normal(kw, (in_dim, out_dim), jnp.float32) * 0.05
        b = jax.random.normal(kb, (1, out_dim), jnp.float32) * 0.05
        return w, b

    params = {
        "embedding": jax.random.normal(keys[0], (vocab, emb_dim),
                                       jnp.float32) * 0.1,
    }
    params["w_in"], params["b_in"] = dense(keys[1], emb_dim, d_model)

    # Output head, padded to C_PAD lanes; pad-class bias = -1e30 so those
    # columns vanish inside the in-kernel log-softmax.
    w_out, b_out = dense(keys[2], maxlen * d_model, n_classes)
    w_out_p = jnp.zeros((maxlen * d_model, C_PAD), jnp.float32)
    w_out_p = w_out_p.at[:, :n_classes].set(w_out)
    b_out_p = jnp.full((1, C_PAD), -1e30, jnp.float32)
    b_out_p = b_out_p.at[:, :n_classes].set(b_out)
    params["w_out"] = w_out_p.reshape(maxlen, d_model, C_PAD)  # per-seq slabs
    params["b_out"] = b_out_p

    w_qkv, b_qkv, w_o = [], [], []
    w_ff1, b_ff1, w_ff2, small = [], [], [], []
    ones = jnp.ones((1, d_model), jnp.float32)
    zeros = jnp.zeros((1, d_model), jnp.float32)
    for l in range(num_layers):
        lk = jax.random.split(keys[3 + l], 6)
        wq, bq = dense(lk[0], d_model, d_model)
        wk, bk = dense(lk[1], d_model, d_model)
        wv, bv = dense(lk[2], d_model, d_model)
        wo, bo = dense(lk[3], d_model, d_model)
        w_qkv.append(jnp.concatenate([wq, wk, wv], axis=1))    # [D, 3D]
        b_qkv.append(jnp.concatenate([bq, bk, bv], axis=1))    # [1, 3D]
        w_o.append(wo)                                         # [D, D]
        w1, b1 = dense(lk[4], d_model, dim_ff)
        w2, b2 = dense(lk[5], dim_ff, d_model)
        w_ff1.append(w1); b_ff1.append(b1); w_ff2.append(w2)
        # small-params slab rows: b_o, ln1_g, ln1_b, b_ff2, ln2_g, ln2_b
        small.append(jnp.concatenate([bo, ones, zeros, b2, ones, zeros], axis=0))

    stack = lambda xs: jnp.stack(xs, axis=0)
    params.update(
        w_qkv=stack(w_qkv), b_qkv=stack(b_qkv), w_o=stack(w_o),
        w_ff1=stack(w_ff1), b_ff1=stack(b_ff1), w_ff2=stack(w_ff2),
        small=stack(small),
    )
    return params


def positional_encoding(seq_len, d_model):
    position = jnp.arange(seq_len, dtype=jnp.float32)[:, None]
    div_term = jnp.exp(jnp.arange(0, d_model, 2, dtype=jnp.float32)
                       * (-math.log(10000.0) / d_model))
    pe = jnp.zeros((seq_len, d_model), jnp.float32)
    pe = pe.at[:, 0::2].set(jnp.sin(position * div_term))
    pe = pe.at[:, 1::2].set(jnp.cos(position * div_term))
    return pe  # [S, D]


# ------------------------------- forward pass -------------------------------

def forward(params, sentence, *, d_model, head, num_layers, n_classes):
    S, B = sentence.shape

    # TODO(synk): embedding lookup is a dynamic row gather; done as jnp.take
    # glue outside the fused kernel.
    tokens_sm = sentence.reshape(-1)                           # [S*B] seq-major
    emb = jnp.take(params["embedding"], tokens_sm, axis=0)     # [S*B, E]

    # Positional encoding (with b_in folded in), replicated seq-major.
    pe_sm = jnp.repeat(positional_encoding(S, d_model) + params["b_in"],
                       B, axis=0)                              # [S*B, D]

    kernel = functools.partial(
        _fused_forward_kernel, num_layers=num_layers, batch=B, seq=S,
        d_model=d_model, head=head, eps=1e-5)

    out_padded = pl.pallas_call(
        kernel,
        out_shape=jax.ShapeDtypeStruct((B, C_PAD), jnp.float32),
    )(emb, pe_sm, params["w_in"],
      params["w_qkv"], params["b_qkv"], params["w_o"],
      params["w_ff1"], params["b_ff1"], params["w_ff2"],
      params["small"],
      params["w_out"], params["b_out"])

    return out_padded[:, :n_classes]


# ---------------------------------- main ------------------------------------

if __name__ == "__main__":
    SEQ, BATCH = 8, 2            # MAXLEN = SEQ (output linear expects MAXLEN*d_model)
    VOCAB, EMB = 50, 16          # glove vocab / embedding dim
    D_MODEL, HEAD = 32, 4
    DIM_FF, NUM_LAYERS, CLASSES = 64, 2, 4

    key = jax.random.PRNGKey(0)
    kp, kx = jax.random.split(key)
    params = init_params(kp, VOCAB, EMB, D_MODEL, HEAD, DIM_FF, NUM_LAYERS,
                         SEQ, CLASSES)
    sentence = jax.random.randint(kx, (SEQ, BATCH), 0, VOCAB, dtype=jnp.int32)

    fwd = jax.jit(functools.partial(forward, d_model=D_MODEL, head=HEAD,
                                    num_layers=NUM_LAYERS, n_classes=CLASSES))
    out = fwd(params, sentence)
    jax.block_until_ready(out)
    assert out.shape == (BATCH, CLASSES)
    assert bool(jnp.all(jnp.isfinite(out)))
    # log-softmax rows should exponentiate-sum to ~1
    assert bool(jnp.all(jnp.abs(jnp.sum(jnp.exp(out), axis=-1) - 1.0) < 1e-3))
    print("KERNEL_OK")
</pallas_src>

<mosaic_0001>
module attributes {stable_mosaic.version = 11 : i64} {
  func.func @_fused_forward_kernel(%arg0: memref<16x16xf32, #tpu.memory_space<vmem>>, %arg1: memref<16x32xf32, #tpu.memory_space<vmem>>, %arg2: memref<16x32xf32, #tpu.memory_space<vmem>>, %arg3: memref<2x32x96xf32, #tpu.memory_space<vmem>>, %arg4: memref<2x1x96xf32, #tpu.memory_space<vmem>>, %arg5: memref<2x32x32xf32, #tpu.memory_space<vmem>>, %arg6: memref<2x32x64xf32, #tpu.memory_space<vmem>>, %arg7: memref<2x1x64xf32, #tpu.memory_space<vmem>>, %arg8: memref<2x64x32xf32, #tpu.memory_space<vmem>>, %arg9: memref<2x6x32xf32, #tpu.memory_space<vmem>>, %arg10: memref<8x32x128xf32, #tpu.memory_space<vmem>>, %arg11: memref<1x128xf32, #tpu.memory_space<vmem>>, %arg12: memref<2x128xf32, #tpu.memory_space<vmem>>) attributes {dimension_semantics = [], scalar_prefetch = 0 : i64, scratch_operands = 0 : i64, tpu.core_type = #tpu.core_type<tc>} {
    %0 = tpu.iota {dimensions = array<i32: 0>} : vector<16x16xi32>
    %c2_i32 = arith.constant 2 : i32
    %c0_i32 = arith.constant 0 : i32
    %1 = arith.cmpi eq, %c2_i32, %c0_i32 : i32
    %c1_i32 = arith.constant 1 : i32
    %2 = arith.select %1, %c1_i32, %c2_i32 : i32
    %3 = vector.broadcast %2 : i32 to vector<16x16xi32>
    %4 = arith.remsi %0, %3 : vector<16x16xi32>
    %c0_i32_0 = arith.constant 0 : i32
    %5 = vector.broadcast %c0_i32_0 : i32 to vector<16x16xi32>
    %6 = arith.cmpi ne, %4, %5 : vector<16x16xi32>
    %c0_i32_1 = arith.constant 0 : i32
    %7 = vector.broadcast %c0_i32_1 : i32 to vector<16x16xi32>
    %8 = arith.cmpi slt, %4, %7 : vector<16x16xi32>
    %c0_i32_2 = arith.constant 0 : i32
    %9 = arith.cmpi slt, %2, %c0_i32_2 : i32
    %10 = vector.broadcast %9 : i1 to vector<16x16xi1>
    %11 = vector.broadcast %10 : vector<16x16xi1> to vector<16x16xi1>
    %12 = arith.xori %8, %11 : vector<16x16xi1>
    %13 = arith.andi %12, %6 : vector<16x16xi1>
    %14 = vector.broadcast %2 : i32 to vector<16x16xi32>
    %15 = arith.addi %4, %14 : vector<16x16xi32>
    %16 = arith.select %13, %15, %4 : vector<16x16xi1>, vector<16x16xi32>
    %17 = tpu.iota {dimensions = array<i32: 1>} : vector<16x16xi32>
    %c2_i32_3 = arith.constant 2 : i32
    %c0_i32_4 = arith.constant 0 : i32
    %18 = arith.cmpi eq, %c2_i32_3, %c0_i32_4 : i32
    %c1_i32_5 = arith.constant 1 : i32
    %19 = arith.select %18, %c1_i32_5, %c2_i32_3 : i32
    %20 = vector.broadcast %19 : i32 to vector<16x16xi32>
    %21 = arith.remsi %17, %20 : vector<16x16xi32>
    %c0_i32_6 = arith.constant 0 : i32
    %22 = vector.broadcast %c0_i32_6 : i32 to vector<16x16xi32>
    %23 = arith.cmpi ne, %21, %22 : vector<16x16xi32>
    %c0_i32_7 = arith.constant 0 : i32
    %24 = vector.broadcast %c0_i32_7 : i32 to vector<16x16xi32>
    %25 = arith.cmpi slt, %21, %24 : vector<16x16xi32>
    %c0_i32_8 = arith.constant 0 : i32
    %26 = arith.cmpi slt, %19, %c0_i32_8 : i32
    %27 = vector.broadcast %26 : i1 to vector<16x16xi1>
    %28 = vector.broadcast %27 : vector<16x16xi1> to vector<16x16xi1>
    %29 = arith.xori %25, %28 : vector<16x16xi1>
    %30 = arith.andi %29, %23 : vector<16x16xi1>
    %31 = vector.broadcast %19 : i32 to vector<16x16xi32>
    %32 = arith.addi %21, %31 : vector<16x16xi32>
    %33 = arith.select %30, %32, %21 : vector<16x16xi1>, vector<16x16xi32>
    %34 = arith.cmpi eq, %16, %33 : vector<16x16xi32>
    %cst = arith.constant 0.000000e+00 : f32
    %cst_9 = arith.constant -1.000000e+30 : f32
    %35 = vector.broadcast %cst : f32 to vector<16x16xf32>
    %36 = vector.broadcast %cst_9 : f32 to vector<16x16xf32>
    %37 = arith.select %34, %35, %36 : vector<16x16xi1>, vector<16x16xf32>
    %c0 = arith.constant 0 : index
    %c0_10 = arith.constant 0 : index
    %38 = vector.load %arg0[%c0, %c0_10] : memref<16x16xf32, #tpu.memory_space<vmem>>, vector<16x16xf32>
    %c0_11 = arith.constant 0 : index
    %c0_12 = arith.constant 0 : index
    %39 = vector.load %arg2[%c0_11, %c0_12] : memref<16x32xf32, #tpu.memory_space<vmem>>, vector<16x32xf32>
    %cst_13 = arith.constant dense<0.000000e+00> : vector<16x32xf32>
    %40 = tpu.matmul %38, %39, %cst_13 {dimension_numbers = #tpu.dot_dimension_numbers<[1], [0], [0], [1], [0, 0, 1, 1], [], []>} : vector<16x16xf32>, vector<16x32xf32>, vector<16x32xf32> -> vector<16x32xf32>
    %c0_14 = arith.constant 0 : index
    %c0_15 = arith.constant 0 : index
    %41 = vector.load %arg1[%c0_14, %c0_15] : memref<16x32xf32, #tpu.memory_space<vmem>>, vector<16x32xf32>
    %42 = arith.addf %40, %41 : vector<16x32xf32>
    %c0_16 = arith.constant 0 : index
    %c0_17 = arith.constant 0 : index
    %c0_18 = arith.constant 0 : index
    %43 = vector.load %arg9[%c0_16, %c0_17, %c0_18] : memref<2x6x32xf32, #tpu.memory_space<vmem>>, vector<1x6x32xf32>
    %44 = vector.shape_cast %43 : vector<1x6x32xf32> to vector<6x32xf32>
    %c0_19 = arith.constant 0 : index
    %c0_20 = arith.constant 0 : index
    %c0_21 = arith.constant 0 : index
    %45 = vector.load %arg3[%c0_19, %c0_20, %c0_21] : memref<2x32x96xf32, #tpu.memory_space<vmem>>, vector<1x32x96xf32>
    %46 = vector.shape_cast %45 : vector<1x32x96xf32> to vector<32x96xf32>
    %cst_22 = arith.constant dense<0.000000e+00> : vector<16x96xf32>
    %47 = tpu.matmul %42, %46, %cst_22 {dimension_numbers = #tpu.dot_dimension_numbers<[1], [0], [0], [1], [0, 0, 1, 1], [], []>} : vector<16x32xf32>, vector<32x96xf32>, vector<16x96xf32> -> vector<16x96xf32>
    %c0_23 = arith.constant 0 : index
    %c0_24 = arith.constant 0 : index
    %c0_25 = arith.constant 0 : index
    %48 = vector.load %arg4[%c0_23, %c0_24, %c0_25] : memref<2x1x96xf32, #tpu.memory_space<vmem>>, vector<1x1x96xf32>
    %49 = vector.shape_cast %48 : vector<1x1x96xf32> to vector<1x96xf32>
    %50 = vector.broadcast %49 : vector<1x96xf32> to vector<16x96xf32>
    %51 = arith.addf %47, %50 : vector<16x96xf32>
    %52 = vector.extract_strided_slice %51 {offsets = [0, 0], sizes = [16, 8], strides = [1, 1]} : vector<16x96xf32> to vector<16x8xf32>
    %53 = vector.extract_strided_slice %51 {offsets = [0, 32], sizes = [16, 8], strides = [1, 1]} : vector<16x96xf32> to vector<16x8xf32>
    %54 = vector.extract_strided_slice %51 {offsets = [0, 64], sizes = [16, 8], strides = [1, 1]} : vector<16x96xf32> to vector<16x8xf32>
    %cst_26 = arith.constant dense<0.000000e+00> : vector<16x16xf32>
    %55 = tpu.matmul %52, %53, %cst_26 {dimension_numbers = #tpu.dot_dimension_numbers<[1], [1], [0], [0], [0, 0, 1, 0], [], []>} : vector<16x8xf32>, vector<16x8xf32>, vector<16x16xf32> -> vector<16x16xf32>
    %cst_27 = arith.constant 0.353553385 : f32
    %56 = vector.broadcast %cst_27 : f32 to vector<16x16xf32>
    %57 = arith.mulf %55, %56 : vector<16x16xf32>
    %58 = arith.addf %57, %37 : vector<16x16xf32>
    %cst_28 = arith.constant dense<0xFF800000> : vector<16xf32>
    %59 = vector.multi_reduction <maximumf>, %58, %cst_28 [1] : vector<16x16xf32> to vector<16xf32>
    %60 = vector.shape_cast %59 : vector<16xf32> to vector<16x1xf32>
    %61 = vector.broadcast %60 : vector<16x1xf32> to vector<16x16xf32>
    %62 = arith.subf %58, %61 : vector<16x16xf32>
    %63 = math.exp %62 : vector<16x16xf32>
    %cst_29 = arith.constant dense<0.000000e+00> : vector<16xf32>
    %64 = vector.multi_reduction <add>, %63, %cst_29 [1] : vector<16x16xf32> to vector<16xf32>
    %65 = vector.shape_cast %64 : vector<16xf32> to vector<16x1xf32>
    %66 = tpu.reciprocal %65 {approx = true} : vector<16x1xf32> -> vector<16x1xf32>
    %67 = vector.broadcast %66 : vector<16x1xf32> to vector<16x16xf32>
    %68 = arith.mulf %63, %67 : vector<16x16xf32>
    %cst_30 = arith.constant dense<0.000000e+00> : vector<16x8xf32>
    %69 = tpu.matmul %68, %54, %cst_30 {dimension_numbers = #tpu.dot_dimension_numbers<[1], [0], [0], [1], [0, 0, 1, 1], [], []>} : vector<16x16xf32>, vector<16x8xf32>, vector<16x8xf32> -> vector<16x8xf32>
    %70 = vector.extract_strided_slice %51 {offsets = [0, 8], sizes = [16, 8], strides = [1, 1]} : vector<16x96xf32> to vector<16x8xf32>
    %71 = vector.extract_strided_slice %51 {offsets = [0, 40], sizes = [16, 8], strides = [1, 1]} : vector<16x96xf32> to vector<16x8xf32>
    %72 = vector.extract_strided_slice %51 {offsets = [0, 72], sizes = [16, 8], strides = [1, 1]} : vector<16x96xf32> to vector<16x8xf32>
    %cst_31 = arith.constant dense<0.000000e+00> : vector<16x16xf32>
    %73 = tpu.matmul %70, %71, %cst_31 {dimension_numbers = #tpu.dot_dimension_numbers<[1], [1], [0], [0], [0, 0, 1, 0], [], []>} : vector<16x8xf32>, vector<16x8xf32>, vector<16x16xf32> -> vector<16x16xf32>
    %cst_32 = arith.constant 0.353553385 : f32
    %74 = vector.broadcast %cst_32 : f32 to vector<16x16xf32>
    %75 = arith.mulf %73, %74 : vector<16x16xf32>
    %76 = arith.addf %75, %37 : vector<16x16xf32>
    %cst_33 = arith.constant dense<0xFF800000> : vector<16xf32>
    %77 = vector.multi_reduction <maximumf>, %76, %cst_33 [1] : vector<16x16xf32> to vector<16xf32>
    %78 = vector.shape_cast %77 : vector<16xf32> to vector<16x1xf32>
    %79 = vector.broadcast %78 : vector<16x1xf32> to vector<16x16xf32>
    %80 = arith.subf %76, %79 : vector<16x16xf32>
    %81 = math.exp %80 : vector<16x16xf32>
    %cst_34 = arith.constant dense<0.000000e+00> : vector<16xf32>
    %82 = vector.multi_reduction <add>, %81, %cst_34 [1] : vector<16x16xf32> to vector<16xf32>
    %83 = vector.shape_cast %82 : vector<16xf32> to vector<16x1xf32>
    %84 = tpu.reciprocal %83 {approx = true} : vector<16x1xf32> -> vector<16x1xf32>
    %85 = vector.broadcast %84 : vector<16x1xf32> to vector<16x16xf32>
    %86 = arith.mulf %81, %85 : vector<16x16xf32>
    %cst_35 = arith.constant dense<0.000000e+00> : vector<16x8xf32>
    %87 = tpu.matmul %86, %72, %cst_35 {dimension_numbers = #tpu.dot_dimension_numbers<[1], [0], [0], [1], [0, 0, 1, 1], [], []>} : vector<16x16xf32>, vector<16x8xf32>, vector<16x8xf32> -> vector<16x8xf32>
    %88 = vector.extract_strided_slice %51 {offsets = [0, 16], sizes = [16, 8], strides = [1, 1]} : vector<16x96xf32> to vector<16x8xf32>
    %89 = vector.extract_strided_slice %51 {offsets = [0, 48], sizes = [16, 8], strides = [1, 1]} : vector<16x96xf32> to vector<16x8xf32>
    %90 = vector.extract_strided_slice %51 {offsets = [0, 80], sizes = [16, 8], strides = [1, 1]} : vector<16x96xf32> to vector<16x8xf32>
    %cst_36 = arith.constant dense<0.000000e+00> : vector<16x16xf32>
    %91 = tpu.matmul %88, %89, %cst_36 {dimension_numbers = #tpu.dot_dimension_numbers<[1], [1], [0], [0], [0, 0, 1, 0], [], []>} : vector<16x8xf32>, vector<16x8xf32>, vector<16x16xf32> -> vector<16x16xf32>
    %cst_37 = arith.constant 0.353553385 : f32
    %92 = vector.broadcast %cst_37 : f32 to vector<16x16xf32>
    %93 = arith.mulf %91, %92 : vector<16x16xf32>
    %94 = arith.addf %93, %37 : vector<16x16xf32>
    %cst_38 = arith.constant dense<0xFF800000> : vector<16xf32>
    %95 = vector.multi_reduction <maximumf>, %94, %cst_38 [1] : vector<16x16xf32> to vector<16xf32>
    %96 = vector.shape_cast %95 : vector<16xf32> to vector<16x1xf32>
    %97 = vector.broadcast %96 : vector<16x1xf32> to vector<16x16xf32>
    %98 = arith.subf %94, %97 : vector<16x16xf32>
    %99 = math.exp %98 : vector<16x16xf32>
    %cst_39 = arith.constant dense<0.000000e+00> : vector<16xf32>
    %100 = vector.multi_reduction <add>, %99, %cst_39 [1] : vector<16x16xf32> to vector<16xf32>
    %101 = vector.shape_cast %100 : vector<16xf32> to vector<16x1xf32>
    %102 = tpu.reciprocal %101 {approx = true} : vector<16x1xf32> -> vector<16x1xf32>
    %103 = vector.broadcast %102 : vector<16x1xf32> to vector<16x16xf32>
    %104 = arith.mulf %99, %103 : vector<16x16xf32>
    %cst_40 = arith.constant dense<0.000000e+00> : vector<16x8xf32>
    %105 = tpu.matmul %104, %90, %cst_40 {dimension_numbers = #tpu.dot_dimension_numbers<[1], [0], [0], [1], [0, 0, 1, 1], [], []>} : vector<16x16xf32>, vector<16x8xf32>, vector<16x8xf32> -> vector<16x8xf32>
    %106 = vector.extract_strided_slice %51 {offsets = [0, 24], sizes = [16, 8], strides = [1, 1]} : vector<16x96xf32> to vector<16x8xf32>
    %107 = vector.extract_strided_slice %51 {offsets = [0, 56], sizes = [16, 8], strides = [1, 1]} : vector<16x96xf32> to vector<16x8xf32>
    %108 = vector.extract_strided_slice %51 {offsets = [0, 88], sizes = [16, 8], strides = [1, 1]} : vector<16x96xf32> to vector<16x8xf32>
    %cst_41 = arith.constant dense<0.000000e+00> : vector<16x16xf32>
    %109 = tpu.matmul %106, %107, %cst_41 {dimension_numbers = #tpu.dot_dimension_numbers<[1], [1], [0], [0], [0, 0, 1, 0], [], []>} : vector<16x8xf32>, vector<16x8xf32>, vector<16x16xf32> -> vector<16x16xf32>
    %cst_42 = arith.constant 0.353553385 : f32
    %110 = vector.broadcast %cst_42 : f32 to vector<16x16xf32>
    %111 = arith.mulf %109, %110 : vector<16x16xf32>
    %112 = arith.addf %111, %37 : vector<16x16xf32>
    %cst_43 = arith.constant dense<0xFF800000> : vector<16xf32>
    %113 = vector.multi_reduction <maximumf>, %112, %cst_43 [1] : vector<16x16xf32> to vector<16xf32>
    %114 = vector.shape_cast %113 : vector<16xf32> to vector<16x1xf32>
    %115 = vector.broadcast %114 : vector<16x1xf32> to vector<16x16xf32>
    %116 = arith.subf %112, %115 : vector<16x16xf32>
    %117 = math.exp %116 : vector<16x16xf32>
    %cst_44 = arith.constant dense<0.000000e+00> : vector<16xf32>
    %118 = vector.multi_reduction <add>, %117, %cst_44 [1] : vector<16x16xf32> to vector<16xf32>
    %119 = vector.shape_cast %118 : vector<16xf32> to vector<16x1xf32>
    %120 = tpu.reciprocal %119 {approx = true} : vector<16x1xf32> -> vector<16x1xf32>
    %121 = vector.broadcast %120 : vector<16x1xf32> to vector<16x16xf32>
    %122 = arith.mulf %117, %121 : vector<16x16xf32>
    %cst_45 = arith.constant dense<0.000000e+00> : vector<16x8xf32>
    %123 = tpu.matmul %122, %108, %cst_45 {dimension_numbers = #tpu.dot_dimension_numbers<[1], [0], [0], [1], [0, 0, 1, 1], [], []>} : vector<16x16xf32>, vector<16x8xf32>, vector<16x8xf32> -> vector<16x8xf32>
    %124 = tpu.concatenate %69, %87, %105, %123 in 1 : vector<16x8xf32>, vector<16x8xf32>, vector<16x8xf32>, vector<16x8xf32> -> vector<16x32xf32>
    %c0_46 = arith.constant 0 : index
    %c0_47 = arith.constant 0 : index
    %c0_48 = arith.constant 0 : index
    %125 = vector.load %arg5[%c0_46, %c0_47, %c0_48] : memref<2x32x32xf32, #tpu.memory_space<vmem>>, vector<1x32x32xf32>
    %126 = vector.shape_cast %125 : vector<1x32x32xf32> to vector<32x32xf32>
    %cst_49 = arith.constant dense<0.000000e+00> : vector<16x32xf32>
    %127 = tpu.matmul %124, %126, %cst_49 {dimension_numbers = #tpu.dot_dimension_numbers<[1], [0], [0], [1], [0, 0, 1, 1], [], []>} : vector<16x32xf32>, vector<32x32xf32>, vector<16x32xf32> -> vector<16x32xf32>
    %128 = vector.extract_strided_slice %44 {offsets = [0, 0], sizes = [1, 32], strides = [1, 1]} : vector<6x32xf32> to vector<1x32xf32>
    %129 = vector.broadcast %128 : vector<1x32xf32> to vector<16x32xf32>
    %130 = arith.addf %127, %129 : vector<16x32xf32>
    %131 = arith.addf %42, %130 : vector<16x32xf32>
    %132 = vector.extract_strided_slice %44 {offsets = [1, 0], sizes = [1, 32], strides = [1, 1]} : vector<6x32xf32> to vector<1x32xf32>
    %133 = vector.extract_strided_slice %44 {offsets = [2, 0], sizes = [1, 32], strides = [1, 1]} : vector<6x32xf32> to vector<1x32xf32>
    %cst_50 = arith.constant dense<0.000000e+00> : vector<16xf32>
    %134 = vector.multi_reduction <add>, %131, %cst_50 [1] : vector<16x32xf32> to vector<16xf32>
    %135 = vector.shape_cast %134 : vector<16xf32> to vector<16x1xf32>
    %cst_51 = arith.constant 3.200000e+01 : f32
    %136 = vector.broadcast %cst_51 : f32 to vector<16x1xf32>
    %137 = arith.divf %135, %136 : vector<16x1xf32>
    %138 = vector.broadcast %137 : vector<16x1xf32> to vector<16x32xf32>
    %139 = arith.subf %131, %138 : vector<16x32xf32>
    %140 = arith.mulf %139, %139 : vector<16x32xf32>
    %cst_52 = arith.constant dense<0.000000e+00> : vector<16xf32>
    %141 = vector.multi_reduction <add>, %140, %cst_52 [1] : vector<16x32xf32> to vector<16xf32>
    %142 = vector.shape_cast %141 : vector<16xf32> to vector<16x1xf32>
    %cst_53 = arith.constant 3.200000e+01 : f32
    %143 = vector.broadcast %cst_53 : f32 to vector<16x1xf32>
    %144 = arith.divf %142, %143 : vector<16x1xf32>
    %145 = vector.broadcast %137 : vector<16x1xf32> to vector<16x32xf32>
    %146 = arith.subf %131, %145 : vector<16x32xf32>
    %cst_54 = arith.constant 9.99999974E-6 : f32
    %147 = vector.broadcast %cst_54 : f32 to vector<16x1xf32>
    %148 = arith.addf %144, %147 : vector<16x1xf32>
    %149 = math.rsqrt %148 : vector<16x1xf32>
    %150 = vector.broadcast %149 : vector<16x1xf32> to vector<16x32xf32>
    %151 = arith.mulf %146, %150 : vector<16x32xf32>
    %152 = vector.broadcast %132 : vector<1x32xf32> to vector<16x32xf32>
    %153 = arith.mulf %151, %152 : vector<16x32xf32>
    %154 = vector.broadcast %133 : vector<1x32xf32> to vector<16x32xf32>
    %155 = arith.addf %153, %154 : vector<16x32xf32>
    %c0_55 = arith.constant 0 : index
    %c0_56 = arith.constant 0 : index
    %c0_57 = arith.constant 0 : index
    %156 = vector.load %arg6[%c0_55, %c0_56, %c0_57] : memref<2x32x64xf32, #tpu.memory_space<vmem>>, vector<1x32x64xf32>
    %157 = vector.shape_cast %156 : vector<1x32x64xf32> to vector<32x64xf32>
    %cst_58 = arith.constant dense<0.000000e+00> : vector<16x64xf32>
    %158 = tpu.matmul %155, %157, %cst_58 {dimension_numbers = #tpu.dot_dimension_numbers<[1], [0], [0], [1], [0, 0, 1, 1], [], []>} : vector<16x32xf32>, vector<32x64xf32>, vector<16x64xf32> -> vector<16x64xf32>
    %c0_59 = arith.constant 0 : index
    %c0_60 = arith.constant 0 : index
    %c0_61 = arith.constant 0 : index
    %159 = vector.load %arg7[%c0_59, %c0_60, %c0_61] : memref<2x1x64xf32, #tpu.memory_space<vmem>>, vector<1x1x64xf32>
    %160 = vector.shape_cast %159 : vector<1x1x64xf32> to vector<1x64xf32>
    %161 = vector.broadcast %160 : vector<1x64xf32> to vector<16x64xf32>
    %162 = arith.addf %158, %161 : vector<16x64xf32>
    %cst_62 = arith.constant 0.000000e+00 : f32
    %163 = vector.broadcast %cst_62 : f32 to vector<16x64xf32>
    %164 = arith.maximumf %162, %163 : vector<16x64xf32>
    %c0_63 = arith.constant 0 : index
    %c0_64 = arith.constant 0 : index
    %c0_65 = arith.constant 0 : index
    %165 = vector.load %arg8[%c0_63, %c0_64, %c0_65] : memref<2x64x32xf32, #tpu.memory_space<vmem>>, vector<1x64x32xf32>
    %166 = vector.shape_cast %165 : vector<1x64x32xf32> to vector<64x32xf32>
    %cst_66 = arith.constant dense<0.000000e+00> : vector<16x32xf32>
    %167 = tpu.matmul %164, %166, %cst_66 {dimension_numbers = #tpu.dot_dimension_numbers<[1], [0], [0], [1], [0, 0, 1, 1], [], []>} : vector<16x64xf32>, vector<64x32xf32>, vector<16x32xf32> -> vector<16x32xf32>
    %168 = vector.extract_strided_slice %44 {offsets = [3, 0], sizes = [1, 32], strides = [1, 1]} : vector<6x32xf32> to vector<1x32xf32>
    %169 = vector.broadcast %168 : vector<1x32xf32> to vector<16x32xf32>
    %170 = arith.addf %167, %169 : vector<16x32xf32>
    %171 = arith.addf %155, %170 : vector<16x32xf32>
    %172 = vector.extract_strided_slice %44 {offsets = [4, 0], sizes = [1, 32], strides = [1, 1]} : vector<6x32xf32> to vector<1x32xf32>
    %173 = vector.extract_strided_slice %44 {offsets = [5, 0], sizes = [1, 32], strides = [1, 1]} : vector<6x32xf32> to vector<1x32xf32>
    %cst_67 = arith.constant dense<0.000000e+00> : vector<16xf32>
    %174 = vector.multi_reduction <add>, %171, %cst_67 [1] : vector<16x32xf32> to vector<16xf32>
    %175 = vector.shape_cast %174 : vector<16xf32> to vector<16x1xf32>
    %cst_68 = arith.constant 3.200000e+01 : f32
    %176 = vector.broadcast %cst_68 : f32 to vector<16x1xf32>
    %177 = arith.divf %175, %176 : vector<16x1xf32>
    %178 = vector.broadcast %177 : vector<16x1xf32> to vector<16x32xf32>
    %179 = arith.subf %171, %178 : vector<16x32xf32>
    %180 = arith.mulf %179, %179 : vector<16x32xf32>
    %cst_69 = arith.constant dense<0.000000e+00> : vector<16xf32>
    %181 = vector.multi_reduction <add>, %180, %cst_69 [1] : vector<16x32xf32> to vector<16xf32>
    %182 = vector.shape_cast %181 : vector<16xf32> to vector<16x1xf32>
    %cst_70 = arith.constant 3.200000e+01 : f32
    %183 = vector.broadcast %cst_70 : f32 to vector<16x1xf32>
    %184 = arith.divf %182, %183 : vector<16x1xf32>
    %185 = vector.broadcast %177 : vector<16x1xf32> to vector<16x32xf32>
    %186 = arith.subf %171, %185 : vector<16x32xf32>
    %cst_71 = arith.constant 9.99999974E-6 : f32
    %187 = vector.broadcast %cst_71 : f32 to vector<16x1xf32>
    %188 = arith.addf %184, %187 : vector<16x1xf32>
    %189 = math.rsqrt %188 : vector<16x1xf32>
    %190 = vector.broadcast %189 : vector<16x1xf32> to vector<16x32xf32>
    %191 = arith.mulf %186, %190 : vector<16x32xf32>
    %192 = vector.broadcast %172 : vector<1x32xf32> to vector<16x32xf32>
    %193 = arith.mulf %191, %192 : vector<16x32xf32>
    %194 = vector.broadcast %173 : vector<1x32xf32> to vector<16x32xf32>
    %195 = arith.addf %193, %194 : vector<16x32xf32>
    %c1 = arith.constant 1 : index
    %c0_72 = arith.constant 0 : index
    %c0_73 = arith.constant 0 : index
    %196 = vector.load %arg9[%c1, %c0_72, %c0_73] : memref<2x6x32xf32, #tpu.memory_space<vmem>>, vector<1x6x32xf32>
    %197 = vector.shape_cast %196 : vector<1x6x32xf32> to vector<6x32xf32>
    %c1_74 = arith.constant 1 : index
    %c0_75 = arith.constant 0 : index
    %c0_76 = arith.constant 0 : index
    %198 = vector.load %arg3[%c1_74, %c0_75, %c0_76] : memref<2x32x96xf32, #tpu.memory_space<vmem>>, vector<1x32x96xf32>
    %199 = vector.shape_cast %198 : vector<1x32x96xf32> to vector<32x96xf32>
    %cst_77 = arith.constant dense<0.000000e+00> : vector<16x96xf32>
    %200 = tpu.matmul %195, %199, %cst_77 {dimension_numbers = #tpu.dot_dimension_numbers<[1], [0], [0], [1], [0, 0, 1, 1], [], []>} : vector<16x32xf32>, vector<32x96xf32>, vector<16x96xf32> -> vector<16x96xf32>
    %c1_78 = arith.constant 1 : index
    %c0_79 = arith.constant 0 : index
    %c0_80 = arith.constant 0 : index
    %201 = vector.load %arg4[%c1_78, %c0_79, %c0_80] : memref<2x1x96xf32, #tpu.memory_space<vmem>>, vector<1x1x96xf32>
    %202 = vector.shape_cast %201 : vector<1x1x96xf32> to vector<1x96xf32>
    %203 = vector.broadcast %202 : vector<1x96xf32> to vector<16x96xf32>
    %204 = arith.addf %200, %203 : vector<16x96xf32>
    %205 = vector.extract_strided_slice %204 {offsets = [0, 0], sizes = [16, 8], strides = [1, 1]} : vector<16x96xf32> to vector<16x8xf32>
    %206 = vector.extract_strided_slice %204 {offsets = [0, 32], sizes = [16, 8], strides = [1, 1]} : vector<16x96xf32> to vector<16x8xf32>
    %207 = vector.extract_strided_slice %204 {offsets = [0, 64], sizes = [16, 8], strides = [1, 1]} : vector<16x96xf32> to vector<16x8xf32>
    %cst_81 = arith.constant dense<0.000000e+00> : vector<16x16xf32>
    %208 = tpu.matmul %205, %206, %cst_81 {dimension_numbers = #tpu.dot_dimension_numbers<[1], [1], [0], [0], [0, 0, 1, 0], [], []>} : vector<16x8xf32>, vector<16x8xf32>, vector<16x16xf32> -> vector<16x16xf32>
    %cst_82 = arith.constant 0.353553385 : f32
    %209 = vector.broadcast %cst_82 : f32 to vector<16x16xf32>
    %210 = arith.mulf %208, %209 : vector<16x16xf32>
    %211 = arith.addf %210, %37 : vector<16x16xf32>
    %cst_83 = arith.constant dense<0xFF800000> : vector<16xf32>
    %212 = vector.multi_reduction <maximumf>, %211, %cst_83 [1] : vector<16x16xf32> to vector<16xf32>
    %213 = vector.shape_cast %212 : vector<16xf32> to vector<16x1xf32>
    %214 = vector.broadcast %213 : vector<16x1xf32> to vector<16x16xf32>
    %215 = arith.subf %211, %214 : vector<16x16xf32>
    %216 = math.exp %215 : vector<16x16xf32>
    %cst_84 = arith.constant dense<0.000000e+00> : vector<16xf32>
    %217 = vector.multi_reduction <add>, %216, %cst_84 [1] : vector<16x16xf32> to vector<16xf32>
    %218 = vector.shape_cast %217 : vector<16xf32> to vector<16x1xf32>
    %219 = tpu.reciprocal %218 {approx = true} : vector<16x1xf32> -> vector<16x1xf32>
    %220 = vector.broadcast %219 : vector<16x1xf32> to vector<16x16xf32>
    %221 = arith.mulf %216, %220 : vector<16x16xf32>
    %cst_85 = arith.constant dense<0.000000e+00> : vector<16x8xf32>
    %222 = tpu.matmul %221, %207, %cst_85 {dimension_numbers = #tpu.dot_dimension_numbers<[1], [0], [0], [1], [0, 0, 1, 1], [], []>} : vector<16x16xf32>, vector<16x8xf32>, vector<16x8xf32> -> vector<16x8xf32>
    %223 = vector.extract_strided_slice %204 {offsets = [0, 8], sizes = [16, 8], strides = [1, 1]} : vector<16x96xf32> to vector<16x8xf32>
    %224 = vector.extract_strided_slice %204 {offsets = [0, 40], sizes = [16, 8], strides = [1, 1]} : vector<16x96xf32> to vector<16x8xf32>
    %225 = vector.extract_strided_slice %204 {offsets = [0, 72], sizes = [16, 8], strides = [1, 1]} : vector<16x96xf32> to vector<16x8xf32>
    %cst_86 = arith.constant dense<0.000000e+00> : vector<16x16xf32>
    %226 = tpu.matmul %223, %224, %cst_86 {dimension_numbers = #tpu.dot_dimension_numbers<[1], [1], [0], [0], [0, 0, 1, 0], [], []>} : vector<16x8xf32>, vector<16x8xf32>, vector<16x16xf32> -> vector<16x16xf32>
    %cst_87 = arith.constant 0.353553385 : f32
    %227 = vector.broadcast %cst_87 : f32 to vector<16x16xf32>
    %228 = arith.mulf %226, %227 : vector<16x16xf32>
    %229 = arith.addf %228, %37 : vector<16x16xf32>
    %cst_88 = arith.constant dense<0xFF800000> : vector<16xf32>
    %230 = vector.multi_reduction <maximumf>, %229, %cst_88 [1] : vector<16x16xf32> to vector<16xf32>
    %231 = vector.shape_cast %230 : vector<16xf32> to vector<16x1xf32>
    %232 = vector.broadcast %231 : vector<16x1xf32> to vector<16x16xf32>
    %233 = arith.subf %229, %232 : vector<16x16xf32>
    %234 = math.exp %233 : vector<16x16xf32>
    %cst_89 = arith.constant dense<0.000000e+00> : vector<16xf32>
    %235 = vector.multi_reduction <add>, %234, %cst_89 [1] : vector<16x16xf32> to vector<16xf32>
    %236 = vector.shape_cast %235 : vector<16xf32> to vector<16x1xf32>
    %237 = tpu.reciprocal %236 {approx = true} : vector<16x1xf32> -> vector<16x1xf32>
    %238 = vector.broadcast %237 : vector<16x1xf32> to vector<16x16xf32>
    %239 = arith.mulf %234, %238 : vector<16x16xf32>
    %cst_90 = arith.constant dense<0.000000e+00> : vector<16x8xf32>
    %240 = tpu.matmul %239, %225, %cst_90 {dimension_numbers = #tpu.dot_dimension_numbers<[1], [0], [0], [1], [0, 0, 1, 1], [], []>} : vector<16x16xf32>, vector<16x8xf32>, vector<16x8xf32> -> vector<16x8xf32>
    %241 = vector.extract_strided_slice %204 {offsets = [0, 16], sizes = [16, 8], strides = [1, 1]} : vector<16x96xf32> to vector<16x8xf32>
    %242 = vector.extract_strided_slice %204 {offsets = [0, 48], sizes = [16, 8], strides = [1, 1]} : vector<16x96xf32> to vector<16x8xf32>
    %243 = vector.extract_strided_slice %204 {offsets = [0, 80], sizes = [16, 8], strides = [1, 1]} : vector<16x96xf32> to vector<16x8xf32>
    %cst_91 = arith.constant dense<0.000000e+00> : vector<16x16xf32>
    %244 = tpu.matmul %241, %242, %cst_91 {dimension_numbers = #tpu.dot_dimension_numbers<[1], [1], [0], [0], [0, 0, 1, 0], [], []>} : vector<16x8xf32>, vector<16x8xf32>, vector<16x16xf32> -> vector<16x16xf32>
    %cst_92 = arith.constant 0.353553385 : f32
    %245 = vector.broadcast %cst_92 : f32 to vector<16x16xf32>
    %246 = arith.mulf %244, %245 : vector<16x16xf32>
    %247 = arith.addf %246, %37 : vector<16x16xf32>
    %cst_93 = arith.constant dense<0xFF800000> : vector<16xf32>
    %248 = vector.multi_reduction <maximumf>, %247, %cst_93 [1] : vector<16x16xf32> to vector<16xf32>
    %249 = vector.shape_cast %248 : vector<16xf32> to vector<16x1xf32>
    %250 = vector.broadcast %249 : vector<16x1xf32> to vector<16x16xf32>
    %251 = arith.subf %247, %250 : vector<16x16xf32>
    %252 = math.exp %251 : vector<16x16xf32>
    %cst_94 = arith.constant dense<0.000000e+00> : vector<16xf32>
    %253 = vector.multi_reduction <add>, %252, %cst_94 [1] : vector<16x16xf32> to vector<16xf32>
    %254 = vector.shape_cast %253 : vector<16xf32> to vector<16x1xf32>
    %255 = tpu.reciprocal %254 {approx = true} : vector<16x1xf32> -> vector<16x1xf32>
    %256 = vector.broadcast %255 : vector<16x1xf32> to vector<16x16xf32>
    %257 = arith.mulf %252, %256 : vector<16x16xf32>
    %cst_95 = arith.constant dense<0.000000e+00> : vector<16x8xf32>
    %258 = tpu.matmul %257, %243, %cst_95 {dimension_numbers = #tpu.dot_dimension_numbers<[1], [0], [0], [1], [0, 0, 1, 1], [], []>} : vector<16x16xf32>, vector<16x8xf32>, vector<16x8xf32> -> vector<16x8xf32>
    %259 = vector.extract_strided_slice %204 {offsets = [0, 24], sizes = [16, 8], strides = [1, 1]} : vector<16x96xf32> to vector<16x8xf32>
    %260 = vector.extract_strided_slice %204 {offsets = [0, 56], sizes = [16, 8], strides = [1, 1]} : vector<16x96xf32> to vector<16x8xf32>
    %261 = vector.extract_strided_slice %204 {offsets = [0, 88], sizes = [16, 8], strides = [1, 1]} : vector<16x96xf32> to vector<16x8xf32>
    %cst_96 = arith.constant dense<0.000000e+00> : vector<16x16xf32>
    %262 = tpu.matmul %259, %260, %cst_96 {dimension_numbers = #tpu.dot_dimension_numbers<[1], [1], [0], [0], [0, 0, 1, 0], [], []>} : vector<16x8xf32>, vector<16x8xf32>, vector<16x16xf32> -> vector<16x16xf32>
    %cst_97 = arith.constant 0.353553385 : f32
    %263 = vector.broadcast %cst_97 : f32 to vector<16x16xf32>
    %264 = arith.mulf %262, %263 : vector<16x16xf32>
    %265 = arith.addf %264, %37 : vector<16x16xf32>
    %cst_98 = arith.constant dense<0xFF800000> : vector<16xf32>
    %266 = vector.multi_reduction <maximumf>, %265, %cst_98 [1] : vector<16x16xf32> to vector<16xf32>
    %267 = vector.shape_cast %266 : vector<16xf32> to vector<16x1xf32>
    %268 = vector.broadcast %267 : vector<16x1xf32> to vector<16x16xf32>
    %269 = arith.subf %265, %268 : vector<16x16xf32>
    %270 = math.exp %269 : vector<16x16xf32>
    %cst_99 = arith.constant dense<0.000000e+00> : vector<16xf32>
    %271 = vector.multi_reduction <add>, %270, %cst_99 [1] : vector<16x16xf32> to vector<16xf32>
    %272 = vector.shape_cast %271 : vector<16xf32> to vector<16x1xf32>
    %273 = tpu.reciprocal %272 {approx = true} : vector<16x1xf32> -> vector<16x1xf32>
    %274 = vector.broadcast %273 : vector<16x1xf32> to vector<16x16xf32>
    %275 = arith.mulf %270, %274 : vector<16x16xf32>
    %cst_100 = arith.constant dense<0.000000e+00> : vector<16x8xf32>
    %276 = tpu.matmul %275, %261, %cst_100 {dimension_numbers = #tpu.dot_dimension_numbers<[1], [0], [0], [1], [0, 0, 1, 1], [], []>} : vector<16x16xf32>, vector<16x8xf32>, vector<16x8xf32> -> vector<16x8xf32>
    %277 = tpu.concatenate %222, %240, %258, %276 in 1 : vector<16x8xf32>, vector<16x8xf32>, vector<16x8xf32>, vector<16x8xf32> -> vector<16x32xf32>
    %c1_101 = arith.constant 1 : index
    %c0_102 = arith.constant 0 : index
    %c0_103 = arith.constant 0 : index
    %278 = vector.load %arg5[%c1_101, %c0_102, %c0_103] : memref<2x32x32xf32, #tpu.memory_space<vmem>>, vector<1x32x32xf32>
    %279 = vector.shape_cast %278 : vector<1x32x32xf32> to vector<32x32xf32>
    %cst_104 = arith.constant dense<0.000000e+00> : vector<16x32xf32>
    %280 = tpu.matmul %277, %279, %cst_104 {dimension_numbers = #tpu.dot_dimension_numbers<[1], [0], [0], [1], [0, 0, 1, 1], [], []>} : vector<16x32xf32>, vector<32x32xf32>, vector<16x32xf32> -> vector<16x32xf32>
    %281 = vector.extract_strided_slice %197 {offsets = [0, 0], sizes = [1, 32], strides = [1, 1]} : vector<6x32xf32> to vector<1x32xf32>
    %282 = vector.broadcast %281 : vector<1x32xf32> to vector<16x32xf32>
    %283 = arith.addf %280, %282 : vector<16x32xf32>
    %284 = arith.addf %195, %283 : vector<16x32xf32>
    %285 = vector.extract_strided_slice %197 {offsets = [1, 0], sizes = [1, 32], strides = [1, 1]} : vector<6x32xf32> to vector<1x32xf32>
    %286 = vector.extract_strided_slice %197 {offsets = [2, 0], sizes = [1, 32], strides = [1, 1]} : vector<6x32xf32> to vector<1x32xf32>
    %cst_105 = arith.constant dense<0.000000e+00> : vector<16xf32>
    %287 = vector.multi_reduction <add>, %284, %cst_105 [1] : vector<16x32xf32> to vector<16xf32>
    %288 = vector.shape_cast %287 : vector<16xf32> to vector<16x1xf32>
    %cst_106 = arith.constant 3.200000e+01 : f32
    %289 = vector.broadcast %cst_106 : f32 to vector<16x1xf32>
    %290 = arith.divf %288, %289 : vector<16x1xf32>
    %291 = vector.broadcast %290 : vector<16x1xf32> to vector<16x32xf32>
    %292 = arith.subf %284, %291 : vector<16x32xf32>
    %293 = arith.mulf %292, %292 : vector<16x32xf32>
    %cst_107 = arith.constant dense<0.000000e+00> : vector<16xf32>
    %294 = vector.multi_reduction <add>, %293, %cst_107 [1] : vector<16x32xf32> to vector<16xf32>
    %295 = vector.shape_cast %294 : vector<16xf32> to vector<16x1xf32>
    %cst_108 = arith.constant 3.200000e+01 : f32
    %296 = vector.broadcast %cst_108 : f32 to vector<16x1xf32>
    %297 = arith.divf %295, %296 : vector<16x1xf32>
    %298 = vector.broadcast %290 : vector<16x1xf32> to vector<16x32xf32>
    %299 = arith.subf %284, %298 : vector<16x32xf32>
    %cst_109 = arith.constant 9.99999974E-6 : f32
    %300 = vector.broadcast %cst_109 : f32 to vector<16x1xf32>
    %301 = arith.addf %297, %300 : vector<16x1xf32>
    %302 = math.rsqrt %301 : vector<16x1xf32>
    %303 = vector.broadcast %302 : vector<16x1xf32> to vector<16x32xf32>
    %304 = arith.mulf %299, %303 : vector<16x32xf32>
    %305 = vector.broadcast %285 : vector<1x32xf32> to vector<16x32xf32>
    %306 = arith.mulf %304, %305 : vector<16x32xf32>
    %307 = vector.broadcast %286 : vector<1x32xf32> to vector<16x32xf32>
    %308 = arith.addf %306, %307 : vector<16x32xf32>
    %c1_110 = arith.constant 1 : index
    %c0_111 = arith.constant 0 : index
    %c0_112 = arith.constant 0 : index
    %309 = vector.load %arg6[%c1_110, %c0_111, %c0_112] : memref<2x32x64xf32, #tpu.memory_space<vmem>>, vector<1x32x64xf32>
    %310 = vector.shape_cast %309 : vector<1x32x64xf32> to vector<32x64xf32>
    %cst_113 = arith.constant dense<0.000000e+00> : vector<16x64xf32>
    %311 = tpu.matmul %308, %310, %cst_113 {dimension_numbers = #tpu.dot_dimension_numbers<[1], [0], [0], [1], [0, 0, 1, 1], [], []>} : vector<16x32xf32>, vector<32x64xf32>, vector<16x64xf32> -> vector<16x64xf32>
    %c1_114 = arith.constant 1 : index
    %c0_115 = arith.constant 0 : index
    %c0_116 = arith.constant 0 : index
    %312 = vector.load %arg7[%c1_114, %c0_115, %c0_116] : memref<2x1x64xf32, #tpu.memory_space<vmem>>, vector<1x1x64xf32>
    %313 = vector.shape_cast %312 : vector<1x1x64xf32> to vector<1x64xf32>
    %314 = vector.broadcast %313 : vector<1x64xf32> to vector<16x64xf32>
    %315 = arith.addf %311, %314 : vector<16x64xf32>
    %cst_117 = arith.constant 0.000000e+00 : f32
    %316 = vector.broadcast %cst_117 : f32 to vector<16x64xf32>
    %317 = arith.maximumf %315, %316 : vector<16x64xf32>
    %c1_118 = arith.constant 1 : index
    %c0_119 = arith.constant 0 : index
    %c0_120 = arith.constant 0 : index
    %318 = vector.load %arg8[%c1_118, %c0_119, %c0_120] : memref<2x64x32xf32, #tpu.memory_space<vmem>>, vector<1x64x32xf32>
    %319 = vector.shape_cast %318 : vector<1x64x32xf32> to vector<64x32xf32>
    %cst_121 = arith.constant dense<0.000000e+00> : vector<16x32xf32>
    %320 = tpu.matmul %317, %319, %cst_121 {dimension_numbers = #tpu.dot_dimension_numbers<[1], [0], [0], [1], [0, 0, 1, 1], [], []>} : vector<16x64xf32>, vector<64x32xf32>, vector<16x32xf32> -> vector<16x32xf32>
    %321 = vector.extract_strided_slice %197 {offsets = [3, 0], sizes = [1, 32], strides = [1, 1]} : vector<6x32xf32> to vector<1x32xf32>
    %322 = vector.broadcast %321 : vector<1x32xf32> to vector<16x32xf32>
    %323 = arith.addf %320, %322 : vector<16x32xf32>
    %324 = arith.addf %308, %323 : vector<16x32xf32>
    %325 = vector.extract_strided_slice %197 {offsets = [4, 0], sizes = [1, 32], strides = [1, 1]} : vector<6x32xf32> to vector<1x32xf32>
    %326 = vector.extract_strided_slice %197 {offsets = [5, 0], sizes = [1, 32], strides = [1, 1]} : vector<6x32xf32> to vector<1x32xf32>
    %cst_122 = arith.constant dense<0.000000e+00> : vector<16xf32>
    %327 = vector.multi_reduction <add>, %324, %cst_122 [1] : vector<16x32xf32> to vector<16xf32>
    %328 = vector.shape_cast %327 : vector<16xf32> to vector<16x1xf32>
    %cst_123 = arith.constant 3.200000e+01 : f32
    %329 = vector.broadcast %cst_123 : f32 to vector<16x1xf32>
    %330 = arith.divf %328, %329 : vector<16x1xf32>
    %331 = vector.broadcast %330 : vector<16x1xf32> to vector<16x32xf32>
    %332 = arith.subf %324, %331 : vector<16x32xf32>
    %333 = arith.mulf %332, %332 : vector<16x32xf32>
    %cst_124 = arith.constant dense<0.000000e+00> : vector<16xf32>
    %334 = vector.multi_reduction <add>, %333, %cst_124 [1] : vector<16x32xf32> to vector<16xf32>
    %335 = vector.shape_cast %334 : vector<16xf32> to vector<16x1xf32>
    %cst_125 = arith.constant 3.200000e+01 : f32
    %336 = vector.broadcast %cst_125 : f32 to vector<16x1xf32>
    %337 = arith.divf %335, %336 : vector<16x1xf32>
    %338 = vector.broadcast %330 : vector<16x1xf32> to vector<16x32xf32>
    %339 = arith.subf %324, %338 : vector<16x32xf32>
    %cst_126 = arith.constant 9.99999974E-6 : f32
    %340 = vector.broadcast %cst_126 : f32 to vector<16x1xf32>
    %341 = arith.addf %337, %340 : vector<16x1xf32>
    %342 = math.rsqrt %341 : vector<16x1xf32>
    %343 = vector.broadcast %342 : vector<16x1xf32> to vector<16x32xf32>
    %344 = arith.mulf %339, %343 : vector<16x32xf32>
    %345 = vector.broadcast %325 : vector<1x32xf32> to vector<16x32xf32>
    %346 = arith.mulf %344, %345 : vector<16x32xf32>
    %347 = vector.broadcast %326 : vector<1x32xf32> to vector<16x32xf32>
    %348 = arith.addf %346, %347 : vector<16x32xf32>
    %cst_127 = arith.constant 0.000000e+00 : f32
    %349 = vector.broadcast %cst_127 : f32 to vector<2x128xf32>
    %350 = vector.extract_strided_slice %348 {offsets = [0, 0], sizes = [2, 32], strides = [1, 1]} : vector<16x32xf32> to vector<2x32xf32>
    %c0_128 = arith.constant 0 : index
    %c0_129 = arith.constant 0 : index
    %c0_130 = arith.constant 0 : index
    %351 = vector.load %arg10[%c0_128, %c0_129, %c0_130] : memref<8x32x128xf32, #tpu.memory_space<vmem>>, vector<1x32x128xf32>
    %352 = vector.shape_cast %351 : vector<1x32x128xf32> to vector<32x128xf32>
    %cst_131 = arith.constant dense<0.000000e+00> : vector<2x128xf32>
    %353 = tpu.matmul %350, %352, %cst_131 {dimension_numbers = #tpu.dot_dimension_numbers<[1], [0], [0], [1], [0, 0, 1, 1], [], []>} : vector<2x32xf32>, vector<32x128xf32>, vector<2x128xf32> -> vector<2x128xf32>
    %354 = arith.addf %349, %353 : vector<2x128xf32>
    %355 = vector.extract_strided_slice %348 {offsets = [2, 0], sizes = [2, 32], strides = [1, 1]} : vector<16x32xf32> to vector<2x32xf32>
    %c1_132 = arith.constant 1 : index
    %c0_133 = arith.constant 0 : index
    %c0_134 = arith.constant 0 : index
    %356 = vector.load %arg10[%c1_132, %c0_133, %c0_134] : memref<8x32x128xf32, #tpu.memory_space<vmem>>, vector<1x32x128xf32>
    %357 = vector.shape_cast %356 : vector<1x32x128xf32> to vector<32x128xf32>
    %cst_135 = arith.constant dense<0.000000e+00> : vector<2x128xf32>
    %358 = tpu.matmul %355, %357, %cst_135 {dimension_numbers = #tpu.dot_dimension_numbers<[1], [0], [0], [1], [0, 0, 1, 1], [], []>} : vector<2x32xf32>, vector<32x128xf32>, vector<2x128xf32> -> vector<2x128xf32>
    %359 = arith.addf %354, %358 : vector<2x128xf32>
    %360 = vector.extract_strided_slice %348 {offsets = [4, 0], sizes = [2, 32], strides = [1, 1]} : vector<16x32xf32> to vector<2x32xf32>
    %c2 = arith.constant 2 : index
    %c0_136 = arith.constant 0 : index
    %c0_137 = arith.constant 0 : index
    %361 = vector.load %arg10[%c2, %c0_136, %c0_137] : memref<8x32x128xf32, #tpu.memory_space<vmem>>, vector<1x32x128xf32>
    %362 = vector.shape_cast %361 : vector<1x32x128xf32> to vector<32x128xf32>
    %cst_138 = arith.constant dense<0.000000e+00> : vector<2x128xf32>
    %363 = tpu.matmul %360, %362, %cst_138 {dimension_numbers = #tpu.dot_dimension_numbers<[1], [0], [0], [1], [0, 0, 1, 1], [], []>} : vector<2x32xf32>, vector<32x128xf32>, vector<2x128xf32> -> vector<2x128xf32>
    %364 = arith.addf %359, %363 : vector<2x128xf32>
    %365 = vector.extract_strided_slice %348 {offsets = [6, 0], sizes = [2, 32], strides = [1, 1]} : vector<16x32xf32> to vector<2x32xf32>
    %c3 = arith.constant 3 : index
    %c0_139 = arith.constant 0 : index
    %c0_140 = arith.constant 0 : index
    %366 = vector.load %arg10[%c3, %c0_139, %c0_140] : memref<8x32x128xf32, #tpu.memory_space<vmem>>, vector<1x32x128xf32>
    %367 = vector.shape_cast %366 : vector<1x32x128xf32> to vector<32x128xf32>
    %cst_141 = arith.constant dense<0.000000e+00> : vector<2x128xf32>
    %368 = tpu.matmul %365, %367, %cst_141 {dimension_numbers = #tpu.dot_dimension_numbers<[1], [0], [0], [1], [0, 0, 1, 1], [], []>} : vector<2x32xf32>, vector<32x128xf32>, vector<2x128xf32> -> vector<2x128xf32>
    %369 = arith.addf %364, %368 : vector<2x128xf32>
    %370 = vector.extract_strided_slice %348 {offsets = [8, 0], sizes = [2, 32], strides = [1, 1]} : vector<16x32xf32> to vector<2x32xf32>
    %c4 = arith.constant 4 : index
    %c0_142 = arith.constant 0 : index
    %c0_143 = arith.constant 0 : index
    %371 = vector.load %arg10[%c4, %c0_142, %c0_143] : memref<8x32x128xf32, #tpu.memory_space<vmem>>, vector<1x32x128xf32>
    %372 = vector.shape_cast %371 : vector<1x32x128xf32> to vector<32x128xf32>
    %cst_144 = arith.constant dense<0.000000e+00> : vector<2x128xf32>
    %373 = tpu.matmul %370, %372, %cst_144 {dimension_numbers = #tpu.dot_dimension_numbers<[1], [0], [0], [1], [0, 0, 1, 1], [], []>} : vector<2x32xf32>, vector<32x128xf32>, vector<2x128xf32> -> vector<2x128xf32>
    %374 = arith.addf %369, %373 : vector<2x128xf32>
    %375 = vector.extract_strided_slice %348 {offsets = [10, 0], sizes = [2, 32], strides = [1, 1]} : vector<16x32xf32> to vector<2x32xf32>
    %c5 = arith.constant 5 : index
    %c0_145 = arith.constant 0 : index
    %c0_146 = arith.constant 0 : index
    %376 = vector.load %arg10[%c5, %c0_145, %c0_146] : memref<8x32x128xf32, #tpu.memory_space<vmem>>, vector<1x32x128xf32>
    %377 = vector.shape_cast %376 : vector<1x32x128xf32> to vector<32x128xf32>
    %cst_147 = arith.constant dense<0.000000e+00> : vector<2x128xf32>
    %378 = tpu.matmul %375, %377, %cst_147 {dimension_numbers = #tpu.dot_dimension_numbers<[1], [0], [0], [1], [0, 0, 1, 1], [], []>} : vector<2x32xf32>, vector<32x128xf32>, vector<2x128xf32> -> vector<2x128xf32>
    %379 = arith.addf %374, %378 : vector<2x128xf32>
    %380 = vector.extract_strided_slice %348 {offsets = [12, 0], sizes = [2, 32], strides = [1, 1]} : vector<16x32xf32> to vector<2x32xf32>
    %c6 = arith.constant 6 : index
    %c0_148 = arith.constant 0 : index
    %c0_149 = arith.constant 0 : index
    %381 = vector.load %arg10[%c6, %c0_148, %c0_149] : memref<8x32x128xf32, #tpu.memory_space<vmem>>, vector<1x32x128xf32>
    %382 = vector.shape_cast %381 : vector<1x32x128xf32> to vector<32x128xf32>
    %cst_150 = arith.constant dense<0.000000e+00> : vector<2x128xf32>
    %383 = tpu.matmul %380, %382, %cst_150 {dimension_numbers = #tpu.dot_dimension_numbers<[1], [0], [0], [1], [0, 0, 1, 1], [], []>} : vector<2x32xf32>, vector<32x128xf32>, vector<2x128xf32> -> vector<2x128xf32>
    %384 = arith.addf %379, %383 : vector<2x128xf32>
    %385 = vector.extract_strided_slice %348 {offsets = [14, 0], sizes = [2, 32], strides = [1, 1]} : vector<16x32xf32> to vector<2x32xf32>
    %c7 = arith.constant 7 : index
    %c0_151 = arith.constant 0 : index
    %c0_152 = arith.constant 0 : index
    %386 = vector.load %arg10[%c7, %c0_151, %c0_152] : memref<8x32x128xf32, #tpu.memory_space<vmem>>, vector<1x32x128xf32>
    %387 = vector.shape_cast %386 : vector<1x32x128xf32> to vector<32x128xf32>
    %cst_153 = arith.constant dense<0.000000e+00> : vector<2x128xf32>
    %388 = tpu.matmul %385, %387, %cst_153 {dimension_numbers = #tpu.dot_dimension_numbers<[1], [0], [0], [1], [0, 0, 1, 1], [], []>} : vector<2x32xf32>, vector<32x128xf32>, vector<2x128xf32> -> vector<2x128xf32>
    %389 = arith.addf %384, %388 : vector<2x128xf32>
    %c0_154 = arith.constant 0 : index
    %c0_155 = arith.constant 0 : index
    %390 = vector.load %arg11[%c0_154, %c0_155] : memref<1x128xf32, #tpu.memory_space<vmem>>, vector<1x128xf32>
    %391 = vector.broadcast %390 : vector<1x128xf32> to vector<2x128xf32>
    %392 = arith.addf %389, %391 : vector<2x128xf32>
    %cst_156 = arith.constant dense<0xFF800000> : vector<2xf32>
    %393 = vector.multi_reduction <maximumf>, %392, %cst_156 [1] : vector<2x128xf32> to vector<2xf32>
    %394 = vector.shape_cast %393 : vector<2xf32> to vector<2x1xf32>
    %395 = vector.broadcast %394 : vector<2x1xf32> to vector<2x128xf32>
    %396 = arith.subf %392, %395 : vector<2x128xf32>
    %397 = math.exp %396 : vector<2x128xf32>
    %cst_157 = arith.constant dense<0.000000e+00> : vector<2xf32>
    %398 = vector.multi_reduction <add>, %397, %cst_157 [1] : vector<2x128xf32> to vector<2xf32>
    %399 = vector.shape_cast %398 : vector<2xf32> to vector<2x1xf32>
    %400 = math.log %399 : vector<2x1xf32>
    %401 = vector.broadcast %400 : vector<2x1xf32> to vector<2x128xf32>
    %402 = arith.subf %396, %401 : vector<2x128xf32>
    %c0_158 = arith.constant 0 : index
    %c0_159 = arith.constant 0 : index
    %403 = vector.load %arg12[%c0_158, %c0_159] : memref<2x128xf32, #tpu.memory_space<vmem>>, vector<2x128xf32>
    tpu.vector_store %arg12[%c0_158, %c0_159], %402 {strides = array<i32>} : memref<2x128xf32, #tpu.memory_space<vmem>>, vector<2x128xf32>,
    return
  }
}

</mosaic_0001>

<llo_original>
// kernel: forward.1
$region0: #{forward.1}
  #allocation0 [shape = 'u32[]', space=smem, size = 0x4, offset = 0x4, fixed_abs, tag = 'smem constant byte address 0x4 - core index']
  #allocation1 [shape = 'u32[72,128]{1,0:T(1,128)}', space=vmem, size = 0x9000, scoped, tag = 'internal scratch']
  %s0 = inlined_call_operand.vmem [shape: f32[16,16], index: 0, kind: input, shape index: {}]
  %s1 = inlined_call_operand.vmem [shape: f32[16,32], index: 1, kind: input, shape index: {}]
  %s2 = inlined_call_operand.vmem [shape: f32[16,32], index: 2, kind: input, shape index: {}]
  %s3 = inlined_call_operand.vmem [shape: f32[2,32,96], index: 3, kind: input, shape index: {}]
  %s4 = inlined_call_operand.vmem [shape: f32[2,1,96], index: 4, kind: input, shape index: {}]
  %s5 = inlined_call_operand.vmem [shape: f32[2,32,32], index: 5, kind: input, shape index: {}]
  %s6 = inlined_call_operand.vmem [shape: f32[2,32,64], index: 6, kind: input, shape index: {}]
  %s7 = inlined_call_operand.vmem [shape: f32[2,1,64], index: 7, kind: input, shape index: {}]
  %s8 = inlined_call_operand.vmem [shape: f32[2,64,32], index: 8, kind: input, shape index: {}]
  %s9 = inlined_call_operand.vmem [shape: f32[2,6,32], index: 9, kind: input, shape index: {}]
  %s10 = inlined_call_operand.vmem [shape: f32[8,32,128], index: 10, kind: input, shape index: {}]
  %s11 = inlined_call_operand.vmem [shape: f32[1,128], index: 11, kind: input, shape index: {}]
  %s12 = inlined_call_operand.hbm [shape: f32[2,128], index: 12, kind: output, shape index: {}]
  %s13 = sld [smem:[#allocation0]]
  $region58: #{forward.1} parent=0
    _
  %s15 = ssub.s32 1, %s13
  %s16 = scalar_select 0, %s15, %s13
  $region1: #{forward.1} parent=0
    #allocation2 [shape = 'u8[1024]{0}', space=vmem, size = 0x400, scoped, tag = 'output window, operand 0, single buffered']
    #allocation3 [shape = 's32[1]{0}', space=sflag, size = 0x4, scoped, tag = 'scoped memory for forward.1']
    %17 = vsyncpa [#allocation3], 0
    // Predicated region
    $region2: #{forward.1} parent=1 // pred_check
      _
    $region3: #{forward.1} parent=1 // pred_check_branch
      %19 = sbr.rel (0) target = $region5
    $region4: #{forward.1} parent=1 // pred_region
      _
    $region5: #{forward.1} parent=1 // pred_fallthru
      _
    // Predicated region
    $region6: #{forward.1} parent=1 // pred_check
      _
    $region7: #{forward.1} parent=1 // pred_check_branch
      %21 = sbr.rel (0) target = $region9
    $region8: #{forward.1} parent=1 // pred_region
      _
    $region9: #{forward.1} parent=1 // pred_fallthru
      _
    // Predicated region
    $region10: #{forward.1} parent=1 // pred_check
      _
    $region11: #{forward.1} parent=1 // pred_check_branch
      %23 = sbr.rel (0) target = $region13
    $region12: #{forward.1} parent=1 // pred_region
      _
    $region13: #{forward.1} parent=1 // pred_fallthru
      _
    // Predicated region
    $region14: #{forward.1} parent=1 // pred_check
      _
    $region15: #{forward.1} parent=1 // pred_check_branch
      %25 = sbr.rel (0) target = $region17
    $region16: #{forward.1} parent=1 // pred_region
      _
    $region17: #{forward.1} parent=1 // pred_fallthru
      _
    // Predicated region
    $region18: #{forward.1} parent=1 // pred_check
      _
    $region19: #{forward.1} parent=1 // pred_check_branch
      %27 = sbr.rel (0) target = $region21
    $region20: #{forward.1} parent=1 // pred_region
      _
    $region21: #{forward.1} parent=1 // pred_fallthru
      _
    // Predicated region
    $region22: #{forward.1} parent=1 // pred_check
      _
    $region23: #{forward.1} parent=1 // pred_check_branch
      %29 = sbr.rel (0) target = $region25
    $region24: #{forward.1} parent=1 // pred_region
      _
    $region25: #{forward.1} parent=1 // pred_fallthru
      _
    // Predicated region
    $region26: #{forward.1} parent=1 // pred_check
      _
    $region27: #{forward.1} parent=1 // pred_check_branch
      %31 = sbr.rel (0) target = $region29
    $region28: #{forward.1} parent=1 // pred_region
      _
    $region29: #{forward.1} parent=1 // pred_fallthru
      _
    // Predicated region
    $region30: #{forward.1} parent=1 // pred_check
      _
    $region31: #{forward.1} parent=1 // pred_check_branch
      %33 = sbr.rel (0) target = $region33
    $region32: #{forward.1} parent=1 // pred_region
      _
    $region33: #{forward.1} parent=1 // pred_fallthru
      _
    // Predicated region
    $region34: #{forward.1} parent=1 // pred_check
      _
    $region35: #{forward.1} parent=1 // pred_check_branch
      %35 = sbr.rel (0) target = $region37
    $region36: #{forward.1} parent=1 // pred_region
      _
    $region37: #{forward.1} parent=1 // pred_fallthru
      _
    // Predicated region
    $region38: #{forward.1} parent=1 // pred_check
      _
    $region39: #{forward.1} parent=1 // pred_check_branch
      %37 = sbr.rel (0) target = $region41
    $region40: #{forward.1} parent=1 // pred_region
      _
    $region41: #{forward.1} parent=1 // pred_fallthru
      _
    // Predicated region
    $region42: #{forward.1} parent=1 // pred_check
      _
    $region43: #{forward.1} parent=1 // pred_check_branch
      %39 = sbr.rel (0) target = $region45
    $region44: #{forward.1} parent=1 // pred_region
      _
    $region45: #{forward.1} parent=1 // pred_fallthru
      _
    // Predicated region
    $region46: #{forward.1} parent=1 // pred_check
      _
    $region47: #{forward.1} parent=1 // pred_check_branch
      %41 = sbr.rel (0) target = $region49
    $region48: #{forward.1} parent=1 // pred_region
      _
    $region49: #{forward.1} parent=1 // pred_fallthru
      _
    %v42 = vlaneseq
    %v43 = vshrl.u32 %v42, 7
    %v44 = vadd.s32 %v43, 8
    %vm45 = vcmp.lt.s32.totalorder %v43, 0
    %v46 = vsub.s32 0, %v43
    %v47 = vsel %vm45, %v46, %v43
    %v48 = vshrl.u32 %v47, 1
    %v49 = vand.u32 %v47, 1
    %v50 = vsub.s32 0, %v49
    %v51 = vsel %vm45, %v50, %v49
    %vm52 = vcmp.lt.s32.totalorder %v44, 0
    %v53 = vsub.s32 0, %v44
    %v54 = vsel %vm52, %v53, %v44
    %v55 = vshrl.u32 %v54, 1
    %v56 = vand.u32 %v54, 1
    %v57 = vsub.s32 0, %v56
    %v58 = vsel %vm52, %v57, %v56
    %vm59 = vcmp.ne.s32.totalorder %v51, 0
    %vm60 = vcmp.ne.s32.totalorder %v58, 0
    %vm61 = vcmp.lt.s32.totalorder %v51, 0
    %vm62 = vcmp.lt.s32.totalorder %v58, 0
    %vm63 = vmand %vm61, %vm59
    %vm64 = vmand %vm62, %vm60
    %v65 = vadd.s32 %v51, 2
    %v66 = vadd.s32 %v58, 2
    %v67 = vsel %vm63, %v65, %v51
    %v68 = vsel %vm64, %v66, %v58
    %v69 = vlaneseq
    %v70 = vand.u32 %v69, 127
    %vm71 = vcmp.lt.s32.totalorder %v70, 0
    %v72 = vsub.s32 0, %v70
    %v73 = vsel %vm71, %v72, %v70
    %v74 = vshrl.u32 %v73, 1
    %v75 = vand.u32 %v73, 1
    %v76 = vsub.s32 0, %v75
    %v77 = vsel %vm71, %v76, %v75
    %vm78 = vcmp.ne.s32.totalorder %v77, 0
    %vm79 = vcmp.lt.s32.totalorder %v77, 0
    %vm80 = vmand %vm79, %vm78
    %v81 = vadd.s32 %v77, 2
    %v82 = vsel %vm80, %v81, %v77
    %vm83 = vcmp.eq.s32.totalorder %v67, %v82
    %vm84 = vcmp.eq.s32.totalorder %v68, %v82
    %v85 = vsel %vm83, 0.0, -1e+30
    %v86 = vsel %vm84, 0.0, -1e+30
    %v87 = vld [vmem:[%s0] sm:$0xff]
    %v88 = vld [vmem:[%s0 + $0x8] sm:$0xff]
    %v89 = vld [vmem:[%s2] sm:$0xff]
    %v90 = vld [vmem:[%s2 + $0x8] sm:$0xff]
    %v91 = vld [vmem:[%s1] sm:$0xff]
    %v92 = vld [vmem:[%s1 + $0x8] sm:$0xff]
    %vm93 = vcmask 130048
    %v95 = vsel %vm93, %v87, 0
    %v98 = vsel %vm93, %v88, 0
    %100 = vmatpush.msra.mxu0 0.0
    %101 = vmatpush.msra.mxu0 0.0
    %102 = vmatpush.msra.mxu0 0.0
    %103 = vmatpush.msra.mxu0 0.0
    %104 = vmatpush.msra.mxu0 0.0
    %105 = vmatpush.msra.mxu0 0.0
    %106 = vmatpush.msra.mxu0 0.0
    %107 = vmatpush.msra.mxu0 0.0
    %108 = vmatpush.msra.mxu0 0.0
    %109 = vmatpush.msra.mxu0 0.0
    %110 = vmatpush.msra.mxu0 0.0
    %111 = vmatpush.msra.mxu0 0.0
    %112 = vmatpush.msra.mxu0 0.0
    %113 = vmatpush.msra.mxu0 0.0
    %114 = vmatpush.msra.mxu0 %v90
    %115 = vmatpush.msra.mxu0 %v89
    %116 = vmatmul.f32.gmra.mxu0 %v95
    %v117 = vpop.f32.mrf.mxu0
    %v118 = vadd.f32 %v91, %v117
    %119 = vmatmul.f32.gmra.mxu0 %v98
    %v120 = vpop.f32.mrf.mxu0
    %v121 = vadd.f32 %v92, %v120
    %122 = vdwg.mxu0
    %v123 = vld [vmem:[%s9] sm:$0x3f]
    %v124 = vld [vmem:[%s3] sm:$0xff]
    %v125 = vld [vmem:[%s3 + $0x8] sm:$0xff]
    %v126 = vld [vmem:[%s3 + $0x10] sm:$0xff]
    %v127 = vld [vmem:[%s3 + $0x18] sm:$0xff]
    %v128 = vld [vmem:[%s4] sm:$0x1]
    %v130 = vperm.slane %v128, 0
    %vm132 = vcmask 261120
    %v134 = vsel %vm132, %v118, 0
    %v137 = vsel %vm132, %v121, 0
    %139 = vmatpush.msra.mxu0 0.0
    %140 = vmatpush.msra.mxu0 0.0
    %141 = vmatpush.msra.mxu0 0.0
    %142 = vmatpush.msra.mxu0 0.0
    %143 = vmatpush.msra.mxu0 0.0
    %144 = vmatpush.msra.mxu0 0.0
    %145 = vmatpush.msra.mxu0 0.0
    %146 = vmatpush.msra.mxu0 0.0
    %147 = vmatpush.msra.mxu0 0.0
    %148 = vmatpush.msra.mxu0 0.0
    %149 = vmatpush.msra.mxu0 0.0
    %150 = vmatpush.msra.mxu0 0.0
    %151 = vmatpush.msra.mxu0 %v127
    %152 = vmatpush.msra.mxu0 %v126
    %153 = vmatpush.msra.mxu0 %v125
    %154 = vmatpush.msra.mxu0 %v124
    %155 = vmatmul.f32.gmra.mxu0 %v134
    %v156 = vpop.f32.mrf.mxu0
    %v157 = vadd.f32 %v130, %v156
    %158 = vmatmul.f32.gmra.mxu0 %v137
    %v159 = vpop.f32.mrf.mxu0
    %v160 = vadd.f32 %v130, %v159
    %161 = vdwg.mxu0
    %164 = vrot.lane.b32.xlu0 %v157, 96
    %v165 = vpop.permute.xlu0 %164
    %166 = vrot.lane.b32.xlu0 %v160, 96
    %v167 = vpop.permute.xlu0 %166
    %vm168 = vcmask 64512
    %v169 = vsel %vm168, %v157, 0
    %v171 = vsel %vm168, %v160, 0
    %v173 = vsel %vm168, %v165, 0
    %v175 = vsel %vm168, %v167, 0
    %177 = vmatpush.xpose.msra.mxu0 0.0
    %178 = vmatpush.xpose.msra.mxu0 0.0
    %179 = vmatpush.xpose.msra.mxu0 0.0
    %180 = vmatpush.xpose.msra.mxu0 0.0
    %181 = vmatpush.xpose.msra.mxu0 0.0
    %182 = vmatpush.xpose.msra.mxu0 0.0
    %183 = vmatpush.xpose.msra.mxu0 0.0
    %184 = vmatpush.xpose.msra.mxu0 0.0
    %185 = vmatpush.xpose.msra.mxu0 0.0
    %186 = vmatpush.xpose.msra.mxu0 0.0
    %187 = vmatpush.xpose.msra.mxu0 0.0
    %188 = vmatpush.xpose.msra.mxu0 0.0
    %189 = vmatpush.xpose.msra.mxu0 0.0
    %190 = vmatpush.xpose.msra.mxu0 0.0
    %191 = vmatpush.xpose.msra.mxu0 %v175
    %192 = vmatpush.xpose.msra.mxu0 %v173
    %193 = vmatmul.f32.gmra.mxu0 %v169
    %v194 = vpop.f32.mrf.mxu0
    %v195 = vadd.f32 0.0, %v194
    %196 = vmatmul.f32.gmra.mxu0 %v171
    %v197 = vpop.f32.mrf.mxu0
    %v198 = vadd.f32 0.0, %v197
    %199 = vdwg.mxu0
    %v200 = vmul.f32 %v195, 0.35355338
    %v201 = vmul.f32 %v198, 0.35355338
    %v202 = vadd.f32 %v200, %v85
    %v203 = vadd.f32 %v201, %v86
    %v204 = vsel %vm93, %v202, -inf
    %205 = vmax.xlane.f32.xlu0 %v204
    %v206 = vpop.xlane.xlu0 %205
    %v207 = vsel %vm93, %v203, -inf
    %208 = vmax.xlane.f32.xlu0 %v207
    %v209 = vpop.xlane.xlu0 %208
    %v210 = vsub.f32 %v202, %v206
    %v211 = vsub.f32 %v203, %v209
    %v212 = vmul.f32 %v210, 1.442695
    %v213 = vpow.pop %v212
    %v214 = vmul.f32 %v211, 1.442695
    %v215 = vpow.pop %v214
    %v216 = vsel %vm93, %v213, 0.0
    %217 = vadd.xlane.f32.xlu0 %v216
    %v218 = vpop.xlane.xlu0 %217
    %v219 = vsel %vm93, %v215, 0.0
    %220 = vadd.xlane.f32.xlu0 %v219
    %v221 = vpop.xlane.xlu0 %220
    %v222 = vrcp.pop %v218
    %v223 = vrcp.pop %v221
    %v224 = vmul.f32 %v213, %v222
    %v225 = vmul.f32 %v215, %v223
    %226 = vrot.lane.b32.xlu0 %v157, 64
    %v227 = vpop.permute.xlu0 %226
    %228 = vrot.lane.b32.xlu0 %v160, 64
    %v229 = vpop.permute.xlu0 %228
    %v233 = vsel %vm93, %v224, 0
    %v236 = vsel %vm93, %v225, 0
    %238 = vmatpush.msra.mxu0 0.0
    %239 = vmatpush.msra.mxu0 0.0
    %240 = vmatpush.msra.mxu0 0.0
    %241 = vmatpush.msra.mxu0 0.0
    %242 = vmatpush.msra.mxu0 0.0
    %243 = vmatpush.msra.mxu0 0.0
    %244 = vmatpush.msra.mxu0 0.0
    %245 = vmatpush.msra.mxu0 0.0
    %246 = vmatpush.msra.mxu0 0.0
    %247 = vmatpush.msra.mxu0 0.0
    %248 = vmatpush.msra.mxu0 0.0
    %249 = vmatpush.msra.mxu0 0.0
    %250 = vmatpush.msra.mxu0 0.0
    %251 = vmatpush.msra.mxu0 0.0
    %252 = vmatpush.msra.mxu0 %v229
    %253 = vmatpush.msra.mxu0 %v227
    %254 = vmatmul.f32.gmra.mxu0 %v233
    %v255 = vpop.f32.mrf.mxu0
    %v256 = vadd.f32 0.0, %v255
    %257 = vmatmul.f32.gmra.mxu0 %v236
    %v258 = vpop.f32.mrf.mxu0
    %v259 = vadd.f32 0.0, %v258
    %260 = vdwg.mxu0
    %261 = vrot.lane.b32.xlu0 %v157, 120
    %v262 = vpop.permute.xlu0 %261
    %263 = vrot.lane.b32.xlu0 %v160, 120
    %v264 = vpop.permute.xlu0 %263
    %265 = vrot.lane.b32.xlu0 %v157, 88
    %v266 = vpop.permute.xlu0 %265
    %267 = vrot.lane.b32.xlu0 %v160, 88
    %v268 = vpop.permute.xlu0 %267
    %v269 = vsel %vm168, %v262, 0
    %v271 = vsel %vm168, %v264, 0
    %v273 = vsel %vm168, %v266, 0
    %v275 = vsel %vm168, %v268, 0
    %277 = vmatpush.xpose.msra.mxu0 0.0
    %278 = vmatpush.xpose.msra.mxu0 0.0
    %279 = vmatpush.xpose.msra.mxu0 0.0
    %280 = vmatpush.xpose.msra.mxu0 0.0
    %281 = vmatpush.xpose.msra.mxu0 0.0
    %282 = vmatpush.xpose.msra.mxu0 0.0
    %283 = vmatpush.xpose.msra.mxu0 0.0
    %284 = vmatpush.xpose.msra.mxu0 0.0
    %285 = vmatpush.xpose.msra.mxu0 0.0
    %286 = vmatpush.xpose.msra.mxu0 0.0
    %287 = vmatpush.xpose.msra.mxu0 0.0
    %288 = vmatpush.xpose.msra.mxu0 0.0
    %289 = vmatpush.xpose.msra.mxu0 0.0
    %290 = vmatpush.xpose.msra.mxu0 0.0
    %291 = vmatpush.xpose.msra.mxu0 %v275
    %292 = vmatpush.xpose.msra.mxu0 %v273
    %293 = vmatmul.f32.gmra.mxu0 %v269
    %v294 = vpop.f32.mrf.mxu0
    %v295 = vadd.f32 0.0, %v294
    %296 = vmatmul.f32.gmra.mxu0 %v271
    %v297 = vpop.f32.mrf.mxu0
    %v298 = vadd.f32 0.0, %v297
    %299 = vdwg.mxu0
    %v300 = vmul.f32 %v295, 0.35355338
    %v301 = vmul.f32 %v298, 0.35355338
    %v302 = vadd.f32 %v300, %v85
    %v303 = vadd.f32 %v301, %v86
    %v304 = vsel %vm93, %v302, -inf
    %305 = vmax.xlane.f32.xlu0 %v304
    %v306 = vpop.xlane.xlu0 %305
    %v307 = vsel %vm93, %v303, -inf
    %308 = vmax.xlane.f32.xlu0 %v307
    %v309 = vpop.xlane.xlu0 %308
    %v310 = vsub.f32 %v302, %v306
    %v311 = vsub.f32 %v303, %v309
    %v312 = vmul.f32 %v310, 1.442695
    %v313 = vpow.pop %v312
    %v314 = vmul.f32 %v311, 1.442695
    %v315 = vpow.pop %v314
    %v316 = vsel %vm93, %v313, 0.0
    %317 = vadd.xlane.f32.xlu0 %v316
    %v318 = vpop.xlane.xlu0 %317
    %v319 = vsel %vm93, %v315, 0.0
    %320 = vadd.xlane.f32.xlu0 %v319
    %v321 = vpop.xlane.xlu0 %320
    %v322 = vrcp.pop %v318
    %v323 = vrcp.pop %v321
    %v324 = vmul.f32 %v313, %v322
    %v325 = vmul.f32 %v315, %v323
    %326 = vrot.lane.b32.xlu0 %v157, 56
    %v327 = vpop.permute.xlu0 %326
    %328 = vrot.lane.b32.xlu0 %v160, 56
    %v329 = vpop.permute.xlu0 %328
    %v333 = vsel %vm93, %v324, 0
    %v336 = vsel %vm93, %v325, 0
    %338 = vmatpush.msra.mxu0 0.0
    %339 = vmatpush.msra.mxu0 0.0
    %340 = vmatpush.msra.mxu0 0.0
    %341 = vmatpush.msra.mxu0 0.0
    %342 = vmatpush.msra.mxu0 0.0
    %343 = vmatpush.msra.mxu0 0.0
    %344 = vmatpush.msra.mxu0 0.0
    %345 = vmatpush.msra.mxu0 0.0
    %346 = vmatpush.msra.mxu0 0.0
    %347 = vmatpush.msra.mxu0 0.0
    %348 = vmatpush.msra.mxu0 0.0
    %349 = vmatpush.msra.mxu0 0.0
    %350 = vmatpush.msra.mxu0 0.0
    %351 = vmatpush.msra.mxu0 0.0
    %352 = vmatpush.msra.mxu0 %v329
    %353 = vmatpush.msra.mxu0 %v327
    %354 = vmatmul.f32.gmra.mxu0 %v333
    %v355 = vpop.f32.mrf.mxu0
    %v356 = vadd.f32 0.0, %v355
    %357 = vmatmul.f32.gmra.mxu0 %v336
    %v358 = vpop.f32.mrf.mxu0
    %v359 = vadd.f32 0.0, %v358
    %360 = vdwg.mxu0
    %361 = vrot.lane.b32.xlu0 %v157, 112
    %v362 = vpop.permute.xlu0 %361
    %363 = vrot.lane.b32.xlu0 %v160, 112
    %v364 = vpop.permute.xlu0 %363
    %365 = vrot.lane.b32.xlu0 %v157, 80
    %v366 = vpop.permute.xlu0 %365
    %367 = vrot.lane.b32.xlu0 %v160, 80
    %v368 = vpop.permute.xlu0 %367
    %v369 = vsel %vm168, %v362, 0
    %v371 = vsel %vm168, %v364, 0
    %v373 = vsel %vm168, %v366, 0
    %v375 = vsel %vm168, %v368, 0
    %377 = vmatpush.xpose.msra.mxu0 0.0
    %378 = vmatpush.xpose.msra.mxu0 0.0
    %379 = vmatpush.xpose.msra.mxu0 0.0
    %380 = vmatpush.xpose.msra.mxu0 0.0
    %381 = vmatpush.xpose.msra.mxu0 0.0
    %382 = vmatpush.xpose.msra.mxu0 0.0
    %383 = vmatpush.xpose.msra.mxu0 0.0
    %384 = vmatpush.xpose.msra.mxu0 0.0
    %385 = vmatpush.xpose.msra.mxu0 0.0
    %386 = vmatpush.xpose.msra.mxu0 0.0
    %387 = vmatpush.xpose.msra.mxu0 0.0
    %388 = vmatpush.xpose.msra.mxu0 0.0
    %389 = vmatpush.xpose.msra.mxu0 0.0
    %390 = vmatpush.xpose.msra.mxu0 0.0
    %391 = vmatpush.xpose.msra.mxu0 %v375
    %392 = vmatpush.xpose.msra.mxu0 %v373
    %393 = vmatmul.f32.gmra.mxu0 %v369
    %v394 = vpop.f32.mrf.mxu0
    %v395 = vadd.f32 0.0, %v394
    %396 = vmatmul.f32.gmra.mxu0 %v371
    %v397 = vpop.f32.mrf.mxu0
    %v398 = vadd.f32 0.0, %v397
    %399 = vdwg.mxu0
    %v400 = vmul.f32 %v395, 0.35355338
    %v401 = vmul.f32 %v398, 0.35355338
    %v402 = vadd.f32 %v400, %v85
    %v403 = vadd.f32 %v401, %v86
    %v404 = vsel %vm93, %v402, -inf
    %405 = vmax.xlane.f32.xlu0 %v404
    %v406 = vpop.xlane.xlu0 %405
    %v407 = vsel %vm93, %v403, -inf
    %408 = vmax.xlane.f32.xlu0 %v407
    %v409 = vpop.xlane.xlu0 %408
    %v410 = vsub.f32 %v402, %v406
    %v411 = vsub.f32 %v403, %v409
    %v412 = vmul.f32 %v410, 1.442695
    %v413 = vpow.pop %v412
    %v414 = vmul.f32 %v411, 1.442695
    %v415 = vpow.pop %v414
    %v416 = vsel %vm93, %v413, 0.0
    %417 = vadd.xlane.f32.xlu0 %v416
    %v418 = vpop.xlane.xlu0 %417
    %v419 = vsel %vm93, %v415, 0.0
    %420 = vadd.xlane.f32.xlu0 %v419
    %v421 = vpop.xlane.xlu0 %420
    %v422 = vrcp.pop %v418
    %v423 = vrcp.pop %v421
    %v424 = vmul.f32 %v413, %v422
    %v425 = vmul.f32 %v415, %v423
    %426 = vrot.lane.b32.xlu0 %v157, 48
    %v427 = vpop.permute.xlu0 %426
    %428 = vrot.lane.b32.xlu0 %v160, 48
    %v429 = vpop.permute.xlu0 %428
    %v433 = vsel %vm93, %v424, 0
    %v436 = vsel %vm93, %v425, 0
    %438 = vmatpush.msra.mxu0 0.0
    %439 = vmatpush.msra.mxu0 0.0
    %440 = vmatpush.msra.mxu0 0.0
    %441 = vmatpush.msra.mxu0 0.0
    %442 = vmatpush.msra.mxu0 0.0
    %443 = vmatpush.msra.mxu0 0.0
    %444 = vmatpush.msra.mxu0 0.0
    %445 = vmatpush.msra.mxu0 0.0
    %446 = vmatpush.msra.mxu0 0.0
    %447 = vmatpush.msra.mxu0 0.0
    %448 = vmatpush.msra.mxu0 0.0
    %449 = vmatpush.msra.mxu0 0.0
    %450 = vmatpush.msra.mxu0 0.0
    %451 = vmatpush.msra.mxu0 0.0
    %452 = vmatpush.msra.mxu0 %v429
    %453 = vmatpush.msra.mxu0 %v427
    %454 = vmatmul.f32.gmra.mxu0 %v433
    %v455 = vpop.f32.mrf.mxu0
    %v456 = vadd.f32 0.0, %v455
    %457 = vmatmul.f32.gmra.mxu0 %v436
    %v458 = vpop.f32.mrf.mxu0
    %v459 = vadd.f32 0.0, %v458
    %460 = vdwg.mxu0
    %461 = vrot.lane.b32.xlu0 %v157, 104
    %v462 = vpop.permute.xlu0 %461
    %463 = vrot.lane.b32.xlu0 %v160, 104
    %v464 = vpop.permute.xlu0 %463
    %465 = vrot.lane.b32.xlu0 %v157, 72
    %v466 = vpop.permute.xlu0 %465
    %467 = vrot.lane.b32.xlu0 %v160, 72
    %v468 = vpop.permute.xlu0 %467
    %v469 = vsel %vm168, %v462, 0
    %v471 = vsel %vm168, %v464, 0
    %v473 = vsel %vm168, %v466, 0
    %v475 = vsel %vm168, %v468, 0
    %477 = vmatpush.xpose.msra.mxu0 0.0
    %478 = vmatpush.xpose.msra.mxu0 0.0
    %479 = vmatpush.xpose.msra.mxu0 0.0
    %480 = vmatpush.xpose.msra.mxu0 0.0
    %481 = vmatpush.xpose.msra.mxu0 0.0
    %482 = vmatpush.xpose.msra.mxu0 0.0
    %483 = vmatpush.xpose.msra.mxu0 0.0
    %484 = vmatpush.xpose.msra.mxu0 0.0
    %485 = vmatpush.xpose.msra.mxu0 0.0
    %486 = vmatpush.xpose.msra.mxu0 0.0
    %487 = vmatpush.xpose.msra.mxu0 0.0
    %488 = vmatpush.xpose.msra.mxu0 0.0
    %489 = vmatpush.xpose.msra.mxu0 0.0
    %490 = vmatpush.xpose.msra.mxu0 0.0
    %491 = vmatpush.xpose.msra.mxu0 %v475
    %492 = vmatpush.xpose.msra.mxu0 %v473
    %493 = vmatmul.f32.gmra.mxu0 %v469
    %v494 = vpop.f32.mrf.mxu0
    %v495 = vadd.f32 0.0, %v494
    %496 = vmatmul.f32.gmra.mxu0 %v471
    %v497 = vpop.f32.mrf.mxu0
    %v498 = vadd.f32 0.0, %v497
    %499 = vdwg.mxu0
    %v500 = vmul.f32 %v495, 0.35355338
    %v501 = vmul.f32 %v498, 0.35355338
    %v502 = vadd.f32 %v500, %v85
    %v503 = vadd.f32 %v501, %v86
    %v504 = vsel %vm93, %v502, -inf
    %505 = vmax.xlane.f32.xlu0 %v504
    %v506 = vpop.xlane.xlu0 %505
    %v507 = vsel %vm93, %v503, -inf
    %508 = vmax.xlane.f32.xlu0 %v507
    %v509 = vpop.xlane.xlu0 %508
    %v510 = vsub.f32 %v502, %v506
    %v511 = vsub.f32 %v503, %v509
    %v512 = vmul.f32 %v510, 1.442695
    %v513 = vpow.pop %v512
    %v514 = vmul.f32 %v511, 1.442695
    %v515 = vpow.pop %v514
    %v516 = vsel %vm93, %v513, 0.0
    %517 = vadd.xlane.f32.xlu0 %v516
    %v518 = vpop.xlane.xlu0 %517
    %v519 = vsel %vm93, %v515, 0.0
    %520 = vadd.xlane.f32.xlu0 %v519
    %v521 = vpop.xlane.xlu0 %520
    %v522 = vrcp.pop %v518
    %v523 = vrcp.pop %v521
    %v524 = vmul.f32 %v513, %v522
    %v525 = vmul.f32 %v515, %v523
    %526 = vrot.lane.b32.xlu0 %v157, 40
    %v527 = vpop.permute.xlu0 %526
    %528 = vrot.lane.b32.xlu0 %v160, 40
    %v529 = vpop.permute.xlu0 %528
    %v533 = vsel %vm93, %v524, 0
    %v536 = vsel %vm93, %v525, 0
    %538 = vmatpush.msra.mxu0 0.0
    %539 = vmatpush.msra.mxu0 0.0
    %540 = vmatpush.msra.mxu0 0.0
    %541 = vmatpush.msra.mxu0 0.0
    %542 = vmatpush.msra.mxu0 0.0
    %543 = vmatpush.msra.mxu0 0.0
    %544 = vmatpush.msra.mxu0 0.0
    %545 = vmatpush.msra.mxu0 0.0
    %546 = vmatpush.msra.mxu0 0.0
    %547 = vmatpush.msra.mxu0 0.0
    %548 = vmatpush.msra.mxu0 0.0
    %549 = vmatpush.msra.mxu0 0.0
    %550 = vmatpush.msra.mxu0 0.0
    %551 = vmatpush.msra.mxu0 0.0
    %552 = vmatpush.msra.mxu0 %v529
    %553 = vmatpush.msra.mxu0 %v527
    %554 = vmatmul.f32.gmra.mxu0 %v533
    %v555 = vpop.f32.mrf.mxu0
    %v556 = vadd.f32 0.0, %v555
    %557 = vmatmul.f32.gmra.mxu0 %v536
    %v558 = vpop.f32.mrf.mxu0
    %v559 = vadd.f32 0.0, %v558
    %560 = vdwg.mxu0
    %563 = vrot.lane.b32.xlu0 %v356, 8
    %v564 = vpop.permute.xlu0 %563
    %565 = vrot.lane.b32.xlu0 %v359, 8
    %v566 = vpop.permute.xlu0 %565
    %571 = vrot.lane.b32.xlu0 %v456, 16
    %v572 = vpop.permute.xlu0 %571
    %573 = vrot.lane.b32.xlu0 %v459, 16
    %v574 = vpop.permute.xlu0 %573
    %579 = vrot.lane.b32.xlu0 %v556, 24
    %v580 = vpop.permute.xlu0 %579
    %581 = vrot.lane.b32.xlu0 %v559, 24
    %v582 = vpop.permute.xlu0 %581
    %v585 = vsel %vm168, %v256, %v564
    %v586 = vsel %vm168, %v259, %v566
    %v587 = vsel %vm93, %v585, %v572
    %v588 = vsel %vm93, %v586, %v574
    %vm589 = vcmask 195584
    %v590 = vsel %vm589, %v587, %v580
    %v591 = vsel %vm589, %v588, %v582
    %v592 = vld [vmem:[%s5] sm:$0xff]
    %v593 = vld [vmem:[%s5 + $0x8] sm:$0xff]
    %v594 = vld [vmem:[%s5 + $0x10] sm:$0xff]
    %v595 = vld [vmem:[%s5 + $0x18] sm:$0xff]
    %v596 = vperm.slane %v123, 0
    %v598 = vsel %vm132, %v590, 0
    %v601 = vsel %vm132, %v591, 0
    %603 = vmatpush.msra.mxu0 0.0
    %604 = vmatpush.msra.mxu0 0.0
    %605 = vmatpush.msra.mxu0 0.0
    %606 = vmatpush.msra.mxu0 0.0
    %607 = vmatpush.msra.mxu0 0.0
    %608 = vmatpush.msra.mxu0 0.0
    %609 = vmatpush.msra.mxu0 0.0
    %610 = vmatpush.msra.mxu0 0.0
    %611 = vmatpush.msra.mxu0 0.0
    %612 = vmatpush.msra.mxu0 0.0
    %613 = vmatpush.msra.mxu0 0.0
    %614 = vmatpush.msra.mxu0 0.0
    %615 = vmatpush.msra.mxu0 %v595
    %616 = vmatpush.msra.mxu0 %v594
    %617 = vmatpush.msra.mxu0 %v593
    %618 = vmatpush.msra.mxu0 %v592
    %619 = vmatmul.f32.gmra.mxu0 %v598
    %v620 = vpop.f32.mrf.mxu0
    %v621 = vadd.f32 %v596, %v620
    %622 = vmatmul.f32.gmra.mxu0 %v601
    %v623 = vpop.f32.mrf.mxu0
    %v624 = vadd.f32 %v596, %v623
    %625 = vdwg.mxu0
    %v626 = vadd.f32 %v118, %v621
    %v627 = vadd.f32 %v121, %v624
    %v628 = vsel %vm132, %v626, 0.0
    %629 = vadd.xlane.f32.xlu0 %v628
    %v630 = vpop.xlane.xlu0 %629
    %v631 = vsel %vm132, %v627, 0.0
    %632 = vadd.xlane.f32.xlu0 %v631
    %v633 = vpop.xlane.xlu0 %632
    %v634 = vrcp.pop 32.0
    %v635 = vmul.f32 32.0, %v634
    %v636 = vsub.f32 1.0, %v635
    %v637 = vmul.f32 %v634, %v636
    %v638 = vadd.f32 %v634, %v637
    %vm639 = vweird.f32 %v634
    %v640 = vsel %vm639, %v634, %v638
    %v641 = vmul.f32 %v630, %v640
    %v642 = vmul.f32 %v633, %v640
    %v643 = vsub.f32 %v626, %v641
    %v644 = vsub.f32 %v627, %v642
    %v645 = vmul.f32 %v643, %v643
    %v646 = vmul.f32 %v644, %v644
    %v647 = vsel %vm132, %v645, 0.0
    %648 = vadd.xlane.f32.xlu0 %v647
    %v649 = vpop.xlane.xlu0 %648
    %v650 = vsel %vm132, %v646, 0.0
    %651 = vadd.xlane.f32.xlu0 %v650
    %v652 = vpop.xlane.xlu0 %651
    %v653 = vmul.f32 %v649, %v640
    %v654 = vmul.f32 %v652, %v640
    %v655 = vadd.f32 %v653, 1e-05
    %v656 = vadd.f32 %v654, 1e-05
    %v657 = vrsqrt.pop %v655
    %v658 = vmul.f32 %v657, %v655
    %v659 = vmul.f32 %v658, %v657
    %v660 = vmul.f32 0.5, %v659
    %v661 = vsub.f32 1.5, %v660
    %v662 = vmul.f32 %v657, %v661
    %vm663 = vweird.f32 %v655
    %vm664 = vweird.f32 %v657
    %vm665 = vmor %vm663, %vm664
    %v666 = vsel %vm665, %v657, %v662
    %v667 = vrsqrt.pop %v656
    %v668 = vmul.f32 %v667, %v656
    %v669 = vmul.f32 %v668, %v667
    %v670 = vmul.f32 0.5, %v669
    %v671 = vsub.f32 1.5, %v670
    %v672 = vmul.f32 %v667, %v671
    %vm673 = vweird.f32 %v656
    %vm674 = vweird.f32 %v667
    %vm675 = vmor %vm673, %vm674
    %v676 = vsel %vm675, %v667, %v672
    %v677 = vmul.f32 %v643, %v666
    %v678 = vmul.f32 %v644, %v676
    %v679 = vperm.slane %v123, 1
    %v680 = vmul.f32 %v677, %v679
    %v681 = vmul.f32 %v678, %v679
    %v682 = vperm.slane %v123, 2
    %v683 = vadd.f32 %v680, %v682
    %v684 = vadd.f32 %v681, %v682
    %v685 = vld [vmem:[%s6] sm:$0xff]
    %v686 = vld [vmem:[%s6 + $0x8] sm:$0xff]
    %v687 = vld [vmem:[%s6 + $0x10] sm:$0xff]
    %v688 = vld [vmem:[%s6 + $0x18] sm:$0xff]
    %v689 = vld [vmem:[%s7] sm:$0x1]
    %v691 = vperm.slane %v689, 0
    %v694 = vsel %vm132, %v683, 0
    %v697 = vsel %vm132, %v684, 0
    %699 = vmatpush.msra.mxu0 0.0
    %700 = vmatpush.msra.mxu0 0.0
    %701 = vmatpush.msra.mxu0 0.0
    %702 = vmatpush.msra.mxu0 0.0
    %703 = vmatpush.msra.mxu0 0.0
    %704 = vmatpush.msra.mxu0 0.0
    %705 = vmatpush.msra.mxu0 0.0
    %706 = vmatpush.msra.mxu0 0.0
    %707 = vmatpush.msra.mxu0 0.0
    %708 = vmatpush.msra.mxu0 0.0
    %709 = vmatpush.msra.mxu0 0.0
    %710 = vmatpush.msra.mxu0 0.0
    %711 = vmatpush.msra.mxu0 %v688
    %712 = vmatpush.msra.mxu0 %v687
    %713 = vmatpush.msra.mxu0 %v686
    %714 = vmatpush.msra.mxu0 %v685
    %715 = vmatmul.f32.gmra.mxu0 %v694
    %v716 = vpop.f32.mrf.mxu0
    %v717 = vadd.f32 %v691, %v716
    %718 = vmatmul.f32.gmra.mxu0 %v697
    %v719 = vpop.f32.mrf.mxu0
    %v720 = vadd.f32 %v691, %v719
    %721 = vdwg.mxu0
    %v722 = vmax.f32 %v717, 0.0
    %v723 = vmax.f32 %v720, 0.0
    %v724 = vld [vmem:[%s8] sm:$0xff]
    %v725 = vld [vmem:[%s8 + $0x8] sm:$0xff]
    %v726 = vld [vmem:[%s8 + $0x10] sm:$0xff]
    %v727 = vld [vmem:[%s8 + $0x18] sm:$0xff]
    %v728 = vld [vmem:[%s8 + $0x20] sm:$0xff]
    %v729 = vld [vmem:[%s8 + $0x28] sm:$0xff]
    %v730 = vld [vmem:[%s8 + $0x30] sm:$0xff]
    %v731 = vld [vmem:[%s8 + $0x38] sm:$0xff]
    %v732 = vperm.slane %v123, 3
    %vm733 = vcmask 523264
    %v735 = vsel %vm733, %v722, 0
    %v738 = vsel %vm733, %v723, 0
    %740 = vmatpush.msra.mxu0 0.0
    %741 = vmatpush.msra.mxu0 0.0
    %742 = vmatpush.msra.mxu0 0.0
    %743 = vmatpush.msra.mxu0 0.0
    %744 = vmatpush.msra.mxu0 0.0
    %745 = vmatpush.msra.mxu0 0.0
    %746 = vmatpush.msra.mxu0 0.0
    %747 = vmatpush.msra.mxu0 0.0
    %748 = vmatpush.msra.mxu0 %v731
    %749 = vmatpush.msra.mxu0 %v730
    %750 = vmatpush.msra.mxu0 %v729
    %751 = vmatpush.msra.mxu0 %v728
    %752 = vmatpush.msra.mxu0 %v727
    %753 = vmatpush.msra.mxu0 %v726
    %754 = vmatpush.msra.mxu0 %v725
    %755 = vmatpush.msra.mxu0 %v724
    %756 = vmatmul.f32.gmra.mxu0 %v735
    %v757 = vpop.f32.mrf.mxu0
    %v758 = vadd.f32 %v732, %v757
    %759 = vmatmul.f32.gmra.mxu0 %v738
    %v760 = vpop.f32.mrf.mxu0
    %v761 = vadd.f32 %v732, %v760
    %762 = vdwg.mxu0
    %v763 = vadd.f32 %v683, %v758
    %v764 = vadd.f32 %v684, %v761
    %v765 = vsel %vm132, %v763, 0.0
    %766 = vadd.xlane.f32.xlu0 %v765
    %v767 = vpop.xlane.xlu0 %766
    %v768 = vsel %vm132, %v764, 0.0
    %769 = vadd.xlane.f32.xlu0 %v768
    %v770 = vpop.xlane.xlu0 %769
    %v771 = vmul.f32 %v767, %v640
    %v772 = vmul.f32 %v770, %v640
    %v773 = vsub.f32 %v763, %v771
    %v774 = vsub.f32 %v764, %v772
    %v775 = vmul.f32 %v773, %v773
    %v776 = vmul.f32 %v774, %v774
    %v777 = vsel %vm132, %v775, 0.0
    %778 = vadd.xlane.f32.xlu0 %v777
    %v779 = vpop.xlane.xlu0 %778
    %v780 = vsel %vm132, %v776, 0.0
    %781 = vadd.xlane.f32.xlu0 %v780
    %v782 = vpop.xlane.xlu0 %781
    %v783 = vmul.f32 %v779, %v640
    %v784 = vmul.f32 %v782, %v640
    %v785 = vadd.f32 %v783, 1e-05
    %v786 = vadd.f32 %v784, 1e-05
    %v787 = vrsqrt.pop %v785
    %v788 = vmul.f32 %v787, %v785
    %v789 = vmul.f32 %v788, %v787
    %v790 = vmul.f32 0.5, %v789
    %v791 = vsub.f32 1.5, %v790
    %v792 = vmul.f32 %v787, %v791
    %vm793 = vweird.f32 %v785
    %vm794 = vweird.f32 %v787
    %vm795 = vmor %vm793, %vm794
    %v796 = vsel %vm795, %v787, %v792
    %v797 = vrsqrt.pop %v786
    %v798 = vmul.f32 %v797, %v786
    %v799 = vmul.f32 %v798, %v797
    %v800 = vmul.f32 0.5, %v799
    %v801 = vsub.f32 1.5, %v800
    %v802 = vmul.f32 %v797, %v801
    %vm803 = vweird.f32 %v786
    %vm804 = vweird.f32 %v797
    %vm805 = vmor %vm803, %vm804
    %v806 = vsel %vm805, %v797, %v802
    %v807 = vmul.f32 %v773, %v796
    %v808 = vmul.f32 %v774, %v806
    %v809 = vperm.slane %v123, 4
    %v810 = vmul.f32 %v807, %v809
    %v811 = vmul.f32 %v808, %v809
    %v812 = vperm.slane %v123, 5
    %v813 = vadd.f32 %v810, %v812
    %v814 = vadd.f32 %v811, %v812
    %s815 = scalar_lea.vmem %s9, 8
    %v816 = vld [vmem:[%s815] sm:$0x3f]
    %s817 = scalar_lea.vmem %s3, 32
    %v818 = vld [vmem:[%s817] sm:$0xff]
    %v819 = vld [vmem:[%s817 + $0x8] sm:$0xff]
    %v820 = vld [vmem:[%s817 + $0x10] sm:$0xff]
    %v821 = vld [vmem:[%s817 + $0x18] sm:$0xff]
    %s822 = scalar_lea.vmem %s4, 1
    %v823 = vld [vmem:[%s822] sm:$0x1]
    %v825 = vperm.slane %v823, 0
    %v828 = vsel %vm132, %v813, 0
    %v831 = vsel %vm132, %v814, 0
    %833 = vmatpush.msra.mxu0 0.0
    %834 = vmatpush.msra.mxu0 0.0
    %835 = vmatpush.msra.mxu0 0.0
    %836 = vmatpush.msra.mxu0 0.0
    %837 = vmatpush.msra.mxu0 0.0
    %838 = vmatpush.msra.mxu0 0.0
    %839 = vmatpush.msra.mxu0 0.0
    %840 = vmatpush.msra.mxu0 0.0
    %841 = vmatpush.msra.mxu0 0.0
    %842 = vmatpush.msra.mxu0 0.0
    %843 = vmatpush.msra.mxu0 0.0
    %844 = vmatpush.msra.mxu0 0.0
    %845 = vmatpush.msra.mxu0 %v821
    %846 = vmatpush.msra.mxu0 %v820
    %847 = vmatpush.msra.mxu0 %v819
    %848 = vmatpush.msra.mxu0 %v818
    %849 = vmatmul.f32.gmra.mxu0 %v828
    %v850 = vpop.f32.mrf.mxu0
    %v851 = vadd.f32 %v825, %v850
    %852 = vmatmul.f32.gmra.mxu0 %v831
    %v853 = vpop.f32.mrf.mxu0
    %v854 = vadd.f32 %v825, %v853
    %855 = vdwg.mxu0
    %858 = vrot.lane.b32.xlu0 %v851, 96
    %v859 = vpop.permute.xlu0 %858
    %860 = vrot.lane.b32.xlu0 %v854, 96
    %v861 = vpop.permute.xlu0 %860
    %v862 = vsel %vm168, %v851, 0
    %v864 = vsel %vm168, %v854, 0
    %v866 = vsel %vm168, %v859, 0
    %v868 = vsel %vm168, %v861, 0
    %870 = vmatpush.xpose.msra.mxu0 0.0
    %871 = vmatpush.xpose.msra.mxu0 0.0
    %872 = vmatpush.xpose.msra.mxu0 0.0
    %873 = vmatpush.xpose.msra.mxu0 0.0
    %874 = vmatpush.xpose.msra.mxu0 0.0
    %875 = vmatpush.xpose.msra.mxu0 0.0
    %876 = vmatpush.xpose.msra.mxu0 0.0
    %877 = vmatpush.xpose.msra.mxu0 0.0
    %878 = vmatpush.xpose.msra.mxu0 0.0
    %879 = vmatpush.xpose.msra.mxu0 0.0
    %880 = vmatpush.xpose.msra.mxu0 0.0
    %881 = vmatpush.xpose.msra.mxu0 0.0
    %882 = vmatpush.xpose.msra.mxu0 0.0
    %883 = vmatpush.xpose.msra.mxu0 0.0
    %884 = vmatpush.xpose.msra.mxu0 %v868
    %885 = vmatpush.xpose.msra.mxu0 %v866
    %886 = vmatmul.f32.gmra.mxu0 %v862
    %v887 = vpop.f32.mrf.mxu0
    %v888 = vadd.f32 0.0, %v887
    %889 = vmatmul.f32.gmra.mxu0 %v864
    %v890 = vpop.f32.mrf.mxu0
    %v891 = vadd.f32 0.0, %v890
    %892 = vdwg.mxu0
    %v893 = vmul.f32 %v888, 0.35355338
    %v894 = vmul.f32 %v891, 0.35355338
    %v895 = vadd.f32 %v893, %v85
    %v896 = vadd.f32 %v894, %v86
    %v897 = vsel %vm93, %v895, -inf
    %898 = vmax.xlane.f32.xlu0 %v897
    %v899 = vpop.xlane.xlu0 %898
    %v900 = vsel %vm93, %v896, -inf
    %901 = vmax.xlane.f32.xlu0 %v900
    %v902 = vpop.xlane.xlu0 %901
    %v903 = vsub.f32 %v895, %v899
    %v904 = vsub.f32 %v896, %v902
    %v905 = vmul.f32 %v903, 1.442695
    %v906 = vpow.pop %v905
    %v907 = vmul.f32 %v904, 1.442695
    %v908 = vpow.pop %v907
    %v909 = vsel %vm93, %v906, 0.0
    %910 = vadd.xlane.f32.xlu0 %v909
    %v911 = vpop.xlane.xlu0 %910
    %v912 = vsel %vm93, %v908, 0.0
    %913 = vadd.xlane.f32.xlu0 %v912
    %v914 = vpop.xlane.xlu0 %913
    %v915 = vrcp.pop %v911
    %v916 = vrcp.pop %v914
    %v917 = vmul.f32 %v906, %v915
    %v918 = vmul.f32 %v908, %v916
    %919 = vrot.lane.b32.xlu0 %v851, 64
    %v920 = vpop.permute.xlu0 %919
    %921 = vrot.lane.b32.xlu0 %v854, 64
    %v922 = vpop.permute.xlu0 %921
    %v926 = vsel %vm93, %v917, 0
    %v929 = vsel %vm93, %v918, 0
    %931 = vmatpush.msra.mxu0 0.0
    %932 = vmatpush.msra.mxu0 0.0
    %933 = vmatpush.msra.mxu0 0.0
    %934 = vmatpush.msra.mxu0 0.0
    %935 = vmatpush.msra.mxu0 0.0
    %936 = vmatpush.msra.mxu0 0.0
    %937 = vmatpush.msra.mxu0 0.0
    %938 = vmatpush.msra.mxu0 0.0
    %939 = vmatpush.msra.mxu0 0.0
    %940 = vmatpush.msra.mxu0 0.0
    %941 = vmatpush.msra.mxu0 0.0
    %942 = vmatpush.msra.mxu0 0.0
    %943 = vmatpush.msra.mxu0 0.0
    %944 = vmatpush.msra.mxu0 0.0
    %945 = vmatpush.msra.mxu0 %v922
    %946 = vmatpush.msra.mxu0 %v920
    %947 = vmatmul.f32.gmra.mxu0 %v926
    %v948 = vpop.f32.mrf.mxu0
    %v949 = vadd.f32 0.0, %v948
    %950 = vmatmul.f32.gmra.mxu0 %v929
    %v951 = vpop.f32.mrf.mxu0
    %v952 = vadd.f32 0.0, %v951
    %953 = vdwg.mxu0
    %954 = vrot.lane.b32.xlu0 %v851, 120
    %v955 = vpop.permute.xlu0 %954
    %956 = vrot.lane.b32.xlu0 %v854, 120
    %v957 = vpop.permute.xlu0 %956
    %958 = vrot.lane.b32.xlu0 %v851, 88
    %v959 = vpop.permute.xlu0 %958
    %960 = vrot.lane.b32.xlu0 %v854, 88
    %v961 = vpop.permute.xlu0 %960
    %v962 = vsel %vm168, %v955, 0
    %v964 = vsel %vm168, %v957, 0
    %v966 = vsel %vm168, %v959, 0
    %v968 = vsel %vm168, %v961, 0
    %970 = vmatpush.xpose.msra.mxu0 0.0
    %971 = vmatpush.xpose.msra.mxu0 0.0
    %972 = vmatpush.xpose.msra.mxu0 0.0
    %973 = vmatpush.xpose.msra.mxu0 0.0
    %974 = vmatpush.xpose.msra.mxu0 0.0
    %975 = vmatpush.xpose.msra.mxu0 0.0
    %976 = vmatpush.xpose.msra.mxu0 0.0
    %977 = vmatpush.xpose.msra.mxu0 0.0
    %978 = vmatpush.xpose.msra.mxu0 0.0
    %979 = vmatpush.xpose.msra.mxu0 0.0
    %980 = vmatpush.xpose.msra.mxu0 0.0
    %981 = vmatpush.xpose.msra.mxu0 0.0
    %982 = vmatpush.xpose.msra.mxu0 0.0
    %983 = vmatpush.xpose.msra.mxu0 0.0
    %984 = vmatpush.xpose.msra.mxu0 %v968
    %985 = vmatpush.xpose.msra.mxu0 %v966
    %986 = vmatmul.f32.gmra.mxu0 %v962
    %v987 = vpop.f32.mrf.mxu0
    %v988 = vadd.f32 0.0, %v987
    %989 = vmatmul.f32.gmra.mxu0 %v964
    %v990 = vpop.f32.mrf.mxu0
    %v991 = vadd.f32 0.0, %v990
    %992 = vdwg.mxu0
    %v993 = vmul.f32 %v988, 0.35355338
    %v994 = vmul.f32 %v991, 0.35355338
    %v995 = vadd.f32 %v993, %v85
    %v996 = vadd.f32 %v994, %v86
    %v997 = vsel %vm93, %v995, -inf
    %998 = vmax.xlane.f32.xlu0 %v997
    %v999 = vpop.xlane.xlu0 %998
    %v1000 = vsel %vm93, %v996, -inf
    %1001 = vmax.xlane.f32.xlu0 %v1000
    %v1002 = vpop.xlane.xlu0 %1001
    %v1003 = vsub.f32 %v995, %v999
    %v1004 = vsub.f32 %v996, %v1002
    %v1005 = vmul.f32 %v1003, 1.442695
    %v1006 = vpow.pop %v1005
    %v1007 = vmul.f32 %v1004, 1.442695
    %v1008 = vpow.pop %v1007
    %v1009 = vsel %vm93, %v1006, 0.0
    %1010 = vadd.xlane.f32.xlu0 %v1009
    %v1011 = vpop.xlane.xlu0 %1010
    %v1012 = vsel %vm93, %v1008, 0.0
    %1013 = vadd.xlane.f32.xlu0 %v1012
    %v1014 = vpop.xlane.xlu0 %1013
    %v1015 = vrcp.pop %v1011
    %v1016 = vrcp.pop %v1014
    %v1017 = vmul.f32 %v1006, %v1015
    %v1018 = vmul.f32 %v1008, %v1016
    %1019 = vrot.lane.b32.xlu0 %v851, 56
    %v1020 = vpop.permute.xlu0 %1019
    %1021 = vrot.lane.b32.xlu0 %v854, 56
    %v1022 = vpop.permute.xlu0 %1021
    %v1026 = vsel %vm93, %v1017, 0
    %v1029 = vsel %vm93, %v1018, 0
    %1031 = vmatpush.msra.mxu0 0.0
    %1032 = vmatpush.msra.mxu0 0.0
    %1033 = vmatpush.msra.mxu0 0.0
    %1034 = vmatpush.msra.mxu0 0.0
    %1035 = vmatpush.msra.mxu0 0.0
    %1036 = vmatpush.msra.mxu0 0.0
    %1037 = vmatpush.msra.mxu0 0.0
    %1038 = vmatpush.msra.mxu0 0.0
    %1039 = vmatpush.msra.mxu0 0.0
    %1040 = vmatpush.msra.mxu0 0.0
    %1041 = vmatpush.msra.mxu0 0.0
    %1042 = vmatpush.msra.mxu0 0.0
    %1043 = vmatpush.msra.mxu0 0.0
    %1044 = vmatpush.msra.mxu0 0.0
    %1045 = vmatpush.msra.mxu0 %v1022
    %1046 = vmatpush.msra.mxu0 %v1020
    %1047 = vmatmul.f32.gmra.mxu0 %v1026
    %v1048 = vpop.f32.mrf.mxu0
    %v1049 = vadd.f32 0.0, %v1048
    %1050 = vmatmul.f32.gmra.mxu0 %v1029
    %v1051 = vpop.f32.mrf.mxu0
    %v1052 = vadd.f32 0.0, %v1051
    %1053 = vdwg.mxu0
    %1054 = vrot.lane.b32.xlu0 %v851, 112
    %v1055 = vpop.permute.xlu0 %1054
    %1056 = vrot.lane.b32.xlu0 %v854, 112
    %v1057 = vpop.permute.xlu0 %1056
    %1058 = vrot.lane.b32.xlu0 %v851, 80
    %v1059 = vpop.permute.xlu0 %1058
    %1060 = vrot.lane.b32.xlu0 %v854, 80
    %v1061 = vpop.permute.xlu0 %1060
    %v1062 = vsel %vm168, %v1055, 0
    %v1064 = vsel %vm168, %v1057, 0
    %v1066 = vsel %vm168, %v1059, 0
    %v1068 = vsel %vm168, %v1061, 0
    %1070 = vmatpush.xpose.msra.mxu0 0.0
    %1071 = vmatpush.xpose.msra.mxu0 0.0
    %1072 = vmatpush.xpose.msra.mxu0 0.0
    %1073 = vmatpush.xpose.msra.mxu0 0.0
    %1074 = vmatpush.xpose.msra.mxu0 0.0
    %1075 = vmatpush.xpose.msra.mxu0 0.0
    %1076 = vmatpush.xpose.msra.mxu0 0.0
    %1077 = vmatpush.xpose.msra.mxu0 0.0
    %1078 = vmatpush.xpose.msra.mxu0 0.0
    %1079 = vmatpush.xpose.msra.mxu0 0.0
    %1080 = vmatpush.xpose.msra.mxu0 0.0
    %1081 = vmatpush.xpose.msra.mxu0 0.0
    %1082 = vmatpush.xpose.msra.mxu0 0.0
    %1083 = vmatpush.xpose.msra.mxu0 0.0
    %1084 = vmatpush.xpose.msra.mxu0 %v1068
    %1085 = vmatpush.xpose.msra.mxu0 %v1066
    %1086 = vmatmul.f32.gmra.mxu0 %v1062
    %v1087 = vpop.f32.mrf.mxu0
    %v1088 = vadd.f32 0.0, %v1087
    %1089 = vmatmul.f32.gmra.mxu0 %v1064
    %v1090 = vpop.f32.mrf.mxu0
    %v1091 = vadd.f32 0.0, %v1090
    %1092 = vdwg.mxu0
    %v1093 = vmul.f32 %v1088, 0.35355338
    %v1094 = vmul.f32 %v1091, 0.35355338
    %v1095 = vadd.f32 %v1093, %v85
    %v1096 = vadd.f32 %v1094, %v86
    %v1097 = vsel %vm93, %v1095, -inf
    %1098 = vmax.xlane.f32.xlu0 %v1097
    %v1099 = vpop.xlane.xlu0 %1098
    %v1100 = vsel %vm93, %v1096, -inf
    %1101 = vmax.xlane.f32.xlu0 %v1100
    %v1102 = vpop.xlane.xlu0 %1101
    %v1103 = vsub.f32 %v1095, %v1099
    %v1104 = vsub.f32 %v1096, %v1102
    %v1105 = vmul.f32 %v1103, 1.442695
    %v1106 = vpow.pop %v1105
    %v1107 = vmul.f32 %v1104, 1.442695
    %v1108 = vpow.pop %v1107
    %v1109 = vsel %vm93, %v1106, 0.0
    %1110 = vadd.xlane.f32.xlu0 %v1109
    %v1111 = vpop.xlane.xlu0 %1110
    %v1112 = vsel %vm93, %v1108, 0.0
    %1113 = vadd.xlane.f32.xlu0 %v1112
    %v1114 = vpop.xlane.xlu0 %1113
    %v1115 = vrcp.pop %v1111
    %v1116 = vrcp.pop %v1114
    %v1117 = vmul.f32 %v1106, %v1115
    %v1118 = vmul.f32 %v1108, %v1116
    %1119 = vrot.lane.b32.xlu0 %v851, 48
    %v1120 = vpop.permute.xlu0 %1119
    %1121 = vrot.lane.b32.xlu0 %v854, 48
    %v1122 = vpop.permute.xlu0 %1121
    %v1126 = vsel %vm93, %v1117, 0
    %v1129 = vsel %vm93, %v1118, 0
    %1131 = vmatpush.msra.mxu0 0.0
    %1132 = vmatpush.msra.mxu0 0.0
    %1133 = vmatpush.msra.mxu0 0.0
    %1134 = vmatpush.msra.mxu0 0.0
    %1135 = vmatpush.msra.mxu0 0.0
    %1136 = vmatpush.msra.mxu0 0.0
    %1137 = vmatpush.msra.mxu0 0.0
    %1138 = vmatpush.msra.mxu0 0.0
    %1139 = vmatpush.msra.mxu0 0.0
    %1140 = vmatpush.msra.mxu0 0.0
    %1141 = vmatpush.msra.mxu0 0.0
    %1142 = vmatpush.msra.mxu0 0.0
    %1143 = vmatpush.msra.mxu0 0.0
    %1144 = vmatpush.msra.mxu0 0.0
    %1145 = vmatpush.msra.mxu0 %v1122
    %1146 = vmatpush.msra.mxu0 %v1120
    %1147 = vmatmul.f32.gmra.mxu0 %v1126
    %v1148 = vpop.f32.mrf.mxu0
    %v1149 = vadd.f32 0.0, %v1148
    %1150 = vmatmul.f32.gmra.mxu0 %v1129
    %v1151 = vpop.f32.mrf.mxu0
    %v1152 = vadd.f32 0.0, %v1151
    %1153 = vdwg.mxu0
    %1154 = vrot.lane.b32.xlu0 %v851, 104
    %v1155 = vpop.permute.xlu0 %1154
    %1156 = vrot.lane.b32.xlu0 %v854, 104
    %v1157 = vpop.permute.xlu0 %1156
    %1158 = vrot.lane.b32.xlu0 %v851, 72
    %v1159 = vpop.permute.xlu0 %1158
    %1160 = vrot.lane.b32.xlu0 %v854, 72
    %v1161 = vpop.permute.xlu0 %1160
    %v1162 = vsel %vm168, %v1155, 0
    %v1164 = vsel %vm168, %v1157, 0
    %v1166 = vsel %vm168, %v1159, 0
    %v1168 = vsel %vm168, %v1161, 0
    %1170 = vmatpush.xpose.msra.mxu0 0.0
    %1171 = vmatpush.xpose.msra.mxu0 0.0
    %1172 = vmatpush.xpose.msra.mxu0 0.0
    %1173 = vmatpush.xpose.msra.mxu0 0.0
    %1174 = vmatpush.xpose.msra.mxu0 0.0
    %1175 = vmatpush.xpose.msra.mxu0 0.0
    %1176 = vmatpush.xpose.msra.mxu0 0.0
    %1177 = vmatpush.xpose.msra.mxu0 0.0
    %1178 = vmatpush.xpose.msra.mxu0 0.0
    %1179 = vmatpush.xpose.msra.mxu0 0.0
    %1180 = vmatpush.xpose.msra.mxu0 0.0
    %1181 = vmatpush.xpose.msra.mxu0 0.0
    %1182 = vmatpush.xpose.msra.mxu0 0.0
    %1183 = vmatpush.xpose.msra.mxu0 0.0
    %1184 = vmatpush.xpose.msra.mxu0 %v1168
    %1185 = vmatpush.xpose.msra.mxu0 %v1166
    %1186 = vmatmul.f32.gmra.mxu0 %v1162
    %v1187 = vpop.f32.mrf.mxu0
    %v1188 = vadd.f32 0.0, %v1187
    %1189 = vmatmul.f32.gmra.mxu0 %v1164
    %v1190 = vpop.f32.mrf.mxu0
    %v1191 = vadd.f32 0.0, %v1190
    %1192 = vdwg.mxu0
    %v1193 = vmul.f32 %v1188, 0.35355338
    %v1194 = vmul.f32 %v1191, 0.35355338
    %v1195 = vadd.f32 %v1193, %v85
    %v1196 = vadd.f32 %v1194, %v86
    %v1197 = vsel %vm93, %v1195, -inf
    %1198 = vmax.xlane.f32.xlu0 %v1197
    %v1199 = vpop.xlane.xlu0 %1198
    %v1200 = vsel %vm93, %v1196, -inf
    %1201 = vmax.xlane.f32.xlu0 %v1200
    %v1202 = vpop.xlane.xlu0 %1201
    %v1203 = vsub.f32 %v1195, %v1199
    %v1204 = vsub.f32 %v1196, %v1202
    %v1205 = vmul.f32 %v1203, 1.442695
    %v1206 = vpow.pop %v1205
    %v1207 = vmul.f32 %v1204, 1.442695
    %v1208 = vpow.pop %v1207
    %v1209 = vsel %vm93, %v1206, 0.0
    %1210 = vadd.xlane.f32.xlu0 %v1209
    %v1211 = vpop.xlane.xlu0 %1210
    %v1212 = vsel %vm93, %v1208, 0.0
    %1213 = vadd.xlane.f32.xlu0 %v1212
    %v1214 = vpop.xlane.xlu0 %1213
    %v1215 = vrcp.pop %v1211
    %v1216 = vrcp.pop %v1214
    %v1217 = vmul.f32 %v1206, %v1215
    %v1218 = vmul.f32 %v1208, %v1216
    %1219 = vrot.lane.b32.xlu0 %v851, 40
    %v1220 = vpop.permute.xlu0 %1219
    %1221 = vrot.lane.b32.xlu0 %v854, 40
    %v1222 = vpop.permute.xlu0 %1221
    %v1226 = vsel %vm93, %v1217, 0
    %v1229 = vsel %vm93, %v1218, 0
    %1231 = vmatpush.msra.mxu0 0.0
    %1232 = vmatpush.msra.mxu0 0.0
    %1233 = vmatpush.msra.mxu0 0.0
    %1234 = vmatpush.msra.mxu0 0.0
    %1235 = vmatpush.msra.mxu0 0.0
    %1236 = vmatpush.msra.mxu0 0.0
    %1237 = vmatpush.msra.mxu0 0.0
    %1238 = vmatpush.msra.mxu0 0.0
    %1239 = vmatpush.msra.mxu0 0.0
    %1240 = vmatpush.msra.mxu0 0.0
    %1241 = vmatpush.msra.mxu0 0.0
    %1242 = vmatpush.msra.mxu0 0.0
    %1243 = vmatpush.msra.mxu0 0.0
    %1244 = vmatpush.msra.mxu0 0.0
    %1245 = vmatpush.msra.mxu0 %v1222
    %1246 = vmatpush.msra.mxu0 %v1220
    %1247 = vmatmul.f32.gmra.mxu0 %v1226
    %v1248 = vpop.f32.mrf.mxu0
    %v1249 = vadd.f32 0.0, %v1248
    %1250 = vmatmul.f32.gmra.mxu0 %v1229
    %v1251 = vpop.f32.mrf.mxu0
    %v1252 = vadd.f32 0.0, %v1251
    %1253 = vdwg.mxu0
    %1256 = vrot.lane.b32.xlu0 %v1049, 8
    %v1257 = vpop.permute.xlu0 %1256
    %1258 = vrot.lane.b32.xlu0 %v1052, 8
    %v1259 = vpop.permute.xlu0 %1258
    %1264 = vrot.lane.b32.xlu0 %v1149, 16
    %v1265 = vpop.permute.xlu0 %1264
    %1266 = vrot.lane.b32.xlu0 %v1152, 16
    %v1267 = vpop.permute.xlu0 %1266
    %1272 = vrot.lane.b32.xlu0 %v1249, 24
    %v1273 = vpop.permute.xlu0 %1272
    %1274 = vrot.lane.b32.xlu0 %v1252, 24
    %v1275 = vpop.permute.xlu0 %1274
    %v1278 = vsel %vm168, %v949, %v1257
    %v1279 = vsel %vm168, %v952, %v1259
    %v1280 = vsel %vm93, %v1278, %v1265
    %v1281 = vsel %vm93, %v1279, %v1267
    %v1282 = vsel %vm589, %v1280, %v1273
    %v1283 = vsel %vm589, %v1281, %v1275
    %s1284 = scalar_lea.vmem %s5, 32
    %v1285 = vld [vmem:[%s1284] sm:$0xff]
    %v1286 = vld [vmem:[%s1284 + $0x8] sm:$0xff]
    %v1287 = vld [vmem:[%s1284 + $0x10] sm:$0xff]
    %v1288 = vld [vmem:[%s1284 + $0x18] sm:$0xff]
    %v1289 = vperm.slane %v816, 0
    %v1291 = vsel %vm132, %v1282, 0
    %v1294 = vsel %vm132, %v1283, 0
    %1296 = vmatpush.msra.mxu0 0.0
    %1297 = vmatpush.msra.mxu0 0.0
    %1298 = vmatpush.msra.mxu0 0.0
    %1299 = vmatpush.msra.mxu0 0.0
    %1300 = vmatpush.msra.mxu0 0.0
    %1301 = vmatpush.msra.mxu0 0.0
    %1302 = vmatpush.msra.mxu0 0.0
    %1303 = vmatpush.msra.mxu0 0.0
    %1304 = vmatpush.msra.mxu0 0.0
    %1305 = vmatpush.msra.mxu0 0.0
    %1306 = vmatpush.msra.mxu0 0.0
    %1307 = vmatpush.msra.mxu0 0.0
    %1308 = vmatpush.msra.mxu0 %v1288
    %1309 = vmatpush.msra.mxu0 %v1287
    %1310 = vmatpush.msra.mxu0 %v1286
    %1311 = vmatpush.msra.mxu0 %v1285
    %1312 = vmatmul.f32.gmra.mxu0 %v1291
    %v1313 = vpop.f32.mrf.mxu0
    %v1314 = vadd.f32 %v1289, %v1313
    %1315 = vmatmul.f32.gmra.mxu0 %v1294
    %v1316 = vpop.f32.mrf.mxu0
    %v1317 = vadd.f32 %v1289, %v1316
    %1318 = vdwg.mxu0
    %v1319 = vadd.f32 %v813, %v1314
    %v1320 = vadd.f32 %v814, %v1317
    %v1321 = vsel %vm132, %v1319, 0.0
    %1322 = vadd.xlane.f32.xlu0 %v1321
    %v1323 = vpop.xlane.xlu0 %1322
    %v1324 = vsel %vm132, %v1320, 0.0
    %1325 = vadd.xlane.f32.xlu0 %v1324
    %v1326 = vpop.xlane.xlu0 %1325
    %v1327 = vmul.f32 %v1323, %v640
    %v1328 = vmul.f32 %v1326, %v640
    %v1329 = vsub.f32 %v1319, %v1327
    %v1330 = vsub.f32 %v1320, %v1328
    %v1331 = vmul.f32 %v1329, %v1329
    %v1332 = vmul.f32 %v1330, %v1330
    %v1333 = vsel %vm132, %v1331, 0.0
    %1334 = vadd.xlane.f32.xlu0 %v1333
    %v1335 = vpop.xlane.xlu0 %1334
    %v1336 = vsel %vm132, %v1332, 0.0
    %1337 = vadd.xlane.f32.xlu0 %v1336
    %v1338 = vpop.xlane.xlu0 %1337
    %v1339 = vmul.f32 %v1335, %v640
    %v1340 = vmul.f32 %v1338, %v640
    %v1341 = vadd.f32 %v1339, 1e-05
    %v1342 = vadd.f32 %v1340, 1e-05
    %v1343 = vrsqrt.pop %v1341
    %v1344 = vmul.f32 %v1343, %v1341
    %v1345 = vmul.f32 %v1344, %v1343
    %v1346 = vmul.f32 0.5, %v1345
    %v1347 = vsub.f32 1.5, %v1346
    %v1348 = vmul.f32 %v1343, %v1347
    %vm1349 = vweird.f32 %v1341
    %vm1350 = vweird.f32 %v1343
    %vm1351 = vmor %vm1349, %vm1350
    %v1352 = vsel %vm1351, %v1343, %v1348
    %v1353 = vrsqrt.pop %v1342
    %v1354 = vmul.f32 %v1353, %v1342
    %v1355 = vmul.f32 %v1354, %v1353
    %v1356 = vmul.f32 0.5, %v1355
    %v1357 = vsub.f32 1.5, %v1356
    %v1358 = vmul.f32 %v1353, %v1357
    %vm1359 = vweird.f32 %v1342
    %vm1360 = vweird.f32 %v1353
    %vm1361 = vmor %vm1359, %vm1360
    %v1362 = vsel %vm1361, %v1353, %v1358
    %v1363 = vmul.f32 %v1329, %v1352
    %v1364 = vmul.f32 %v1330, %v1362
    %v1365 = vperm.slane %v816, 1
    %v1366 = vmul.f32 %v1363, %v1365
    %v1367 = vmul.f32 %v1364, %v1365
    %v1368 = vperm.slane %v816, 2
    %v1369 = vadd.f32 %v1366, %v1368
    %v1370 = vadd.f32 %v1367, %v1368
    %s1371 = scalar_lea.vmem %s6, 32
    %v1372 = vld [vmem:[%s1371] sm:$0xff]
    %v1373 = vld [vmem:[%s1371 + $0x8] sm:$0xff]
    %v1374 = vld [vmem:[%s1371 + $0x10] sm:$0xff]
    %v1375 = vld [vmem:[%s1371 + $0x18] sm:$0xff]
    %s1376 = scalar_lea.vmem %s7, 1
    %v1377 = vld [vmem:[%s1376] sm:$0x1]
    %v1379 = vperm.slane %v1377, 0
    %v1382 = vsel %vm132, %v1369, 0
    %v1385 = vsel %vm132, %v1370, 0
    %1387 = vmatpush.msra.mxu0 0.0
    %1388 = vmatpush.msra.mxu0 0.0
    %1389 = vmatpush.msra.mxu0 0.0
    %1390 = vmatpush.msra.mxu0 0.0
    %1391 = vmatpush.msra.mxu0 0.0
    %1392 = vmatpush.msra.mxu0 0.0
    %1393 = vmatpush.msra.mxu0 0.0
    %1394 = vmatpush.msra.mxu0 0.0
    %1395 = vmatpush.msra.mxu0 0.0
    %1396 = vmatpush.msra.mxu0 0.0
    %1397 = vmatpush.msra.mxu0 0.0
    %1398 = vmatpush.msra.mxu0 0.0
    %1399 = vmatpush.msra.mxu0 %v1375
    %1400 = vmatpush.msra.mxu0 %v1374
    %1401 = vmatpush.msra.mxu0 %v1373
    %1402 = vmatpush.msra.mxu0 %v1372
    %1403 = vmatmul.f32.gmra.mxu0 %v1382
    %v1404 = vpop.f32.mrf.mxu0
    %v1405 = vadd.f32 %v1379, %v1404
    %1406 = vmatmul.f32.gmra.mxu0 %v1385
    %v1407 = vpop.f32.mrf.mxu0
    %v1408 = vadd.f32 %v1379, %v1407
    %1409 = vdwg.mxu0
    %v1410 = vmax.f32 %v1405, 0.0
    %v1411 = vmax.f32 %v1408, 0.0
    %s1412 = scalar_lea.vmem %s8, 64
    %v1413 = vld [vmem:[%s1412] sm:$0xff]
    %v1414 = vld [vmem:[%s1412 + $0x8] sm:$0xff]
    %v1415 = vld [vmem:[%s1412 + $0x10] sm:$0xff]
    %v1416 = vld [vmem:[%s1412 + $0x18] sm:$0xff]
    %v1417 = vld [vmem:[%s1412 + $0x20] sm:$0xff]
    %v1418 = vld [vmem:[%s1412 + $0x28] sm:$0xff]
    %v1419 = vld [vmem:[%s1412 + $0x30] sm:$0xff]
    %v1420 = vld [vmem:[%s1412 + $0x38] sm:$0xff]
    %v1421 = vperm.slane %v816, 3
    %v1423 = vsel %vm733, %v1410, 0
    %v1426 = vsel %vm733, %v1411, 0
    %1428 = vmatpush.msra.mxu0 0.0
    %1429 = vmatpush.msra.mxu0 0.0
    %1430 = vmatpush.msra.mxu0 0.0
    %1431 = vmatpush.msra.mxu0 0.0
    %1432 = vmatpush.msra.mxu0 0.0
    %1433 = vmatpush.msra.mxu0 0.0
    %1434 = vmatpush.msra.mxu0 0.0
    %1435 = vmatpush.msra.mxu0 0.0
    %1436 = vmatpush.msra.mxu0 %v1420
    %1437 = vmatpush.msra.mxu0 %v1419
    %1438 = vmatpush.msra.mxu0 %v1418
    %1439 = vmatpush.msra.mxu0 %v1417
    %1440 = vmatpush.msra.mxu0 %v1416
    %1441 = vmatpush.msra.mxu0 %v1415
    %1442 = vmatpush.msra.mxu0 %v1414
    %1443 = vmatpush.msra.mxu0 %v1413
    %1444 = vmatmul.f32.gmra.mxu0 %v1423
    %v1445 = vpop.f32.mrf.mxu0
    %v1446 = vadd.f32 %v1421, %v1445
    %1447 = vmatmul.f32.gmra.mxu0 %v1426
    %v1448 = vpop.f32.mrf.mxu0
    %v1449 = vadd.f32 %v1421, %v1448
    %1450 = vdwg.mxu0
    %v1451 = vadd.f32 %v1369, %v1446
    %v1452 = vadd.f32 %v1370, %v1449
    %v1453 = vsel %vm132, %v1451, 0.0
    %1454 = vadd.xlane.f32.xlu0 %v1453
    %v1455 = vpop.xlane.xlu0 %1454
    %v1456 = vsel %vm132, %v1452, 0.0
    %1457 = vadd.xlane.f32.xlu0 %v1456
    %v1458 = vpop.xlane.xlu0 %1457
    %v1459 = vmul.f32 %v1455, %v640
    %v1460 = vmul.f32 %v1458, %v640
    %v1461 = vsub.f32 %v1451, %v1459
    %v1462 = vsub.f32 %v1452, %v1460
    %v1463 = vmul.f32 %v1461, %v1461
    %v1464 = vmul.f32 %v1462, %v1462
    %v1465 = vsel %vm132, %v1463, 0.0
    %1466 = vadd.xlane.f32.xlu0 %v1465
    %v1467 = vpop.xlane.xlu0 %1466
    %v1468 = vsel %vm132, %v1464, 0.0
    %1469 = vadd.xlane.f32.xlu0 %v1468
    %v1470 = vpop.xlane.xlu0 %1469
    %v1471 = vmul.f32 %v1467, %v640
    %v1472 = vmul.f32 %v1470, %v640
    %v1473 = vadd.f32 %v1471, 1e-05
    %v1474 = vadd.f32 %v1472, 1e-05
    %v1475 = vrsqrt.pop %v1473
    %v1476 = vmul.f32 %v1475, %v1473
    %v1477 = vmul.f32 %v1476, %v1475
    %v1478 = vmul.f32 0.5, %v1477
    %v1479 = vsub.f32 1.5, %v1478
    %v1480 = vmul.f32 %v1475, %v1479
    %vm1481 = vweird.f32 %v1473
    %vm1482 = vweird.f32 %v1475
    %vm1483 = vmor %vm1481, %vm1482
    %v1484 = vsel %vm1483, %v1475, %v1480
    %v1485 = vrsqrt.pop %v1474
    %v1486 = vmul.f32 %v1485, %v1474
    %v1487 = vmul.f32 %v1486, %v1485
    %v1488 = vmul.f32 0.5, %v1487
    %v1489 = vsub.f32 1.5, %v1488
    %v1490 = vmul.f32 %v1485, %v1489
    %vm1491 = vweird.f32 %v1474
    %vm1492 = vweird.f32 %v1485
    %vm1493 = vmor %vm1491, %vm1492
    %v1494 = vsel %vm1493, %v1485, %v1490
    %v1495 = vmul.f32 %v1461, %v1484
    %v1496 = vmul.f32 %v1462, %v1494
    %v1497 = vperm.slane %v816, 4
    %v1498 = vmul.f32 %v1495, %v1497
    %v1499 = vmul.f32 %v1496, %v1497
    %v1500 = vperm.slane %v816, 5
    %v1501 = vadd.f32 %v1498, %v1500
    %v1502 = vadd.f32 %v1499, %v1500
    %v1503 = vld [vmem:[%s10] sm:$0xff]
    %v1504 = vld [vmem:[%s10 + $0x8] sm:$0xff]
    %v1505 = vld [vmem:[%s10 + $0x10] sm:$0xff]
    %v1506 = vld [vmem:[%s10 + $0x18] sm:$0xff]
    %s1507 = scalar_lea.vmem %s10, 32
    %v1508 = vld [vmem:[%s1507] sm:$0xff]
    %v1509 = vld [vmem:[%s1507 + $0x8] sm:$0xff]
    %v1510 = vld [vmem:[%s1507 + $0x10] sm:$0xff]
    %v1511 = vld [vmem:[%s1507 + $0x18] sm:$0xff]
    %v1513 = vrot.slane %v1501, 2
    %v1514 = vsel %vm132, %v1513, 0
    %1516 = vmatpush.msra.mxu0 0.0
    %1517 = vmatpush.msra.mxu0 0.0
    %1518 = vmatpush.msra.mxu0 0.0
    %1519 = vmatpush.msra.mxu0 0.0
    %1520 = vmatpush.msra.mxu0 0.0
    %1521 = vmatpush.msra.mxu0 0.0
    %1522 = vmatpush.msra.mxu0 0.0
    %1523 = vmatpush.msra.mxu0 0.0
    %1524 = vmatpush.msra.mxu0 0.0
    %1525 = vmatpush.msra.mxu0 0.0
    %1526 = vmatpush.msra.mxu0 0.0
    %1527 = vmatpush.msra.mxu0 0.0
    %1528 = vmatpush.msra.mxu0 %v1511
    %1529 = vmatpush.msra.mxu0 %v1510
    %1530 = vmatpush.msra.mxu0 %v1509
    %1531 = vmatpush.msra.mxu0 %v1508
    %1532 = vmatmul.f32.gmra.mxu0 %v1514
    %v1533 = vpop.f32.mrf.mxu0
    %v1534 = vadd.f32 0.0, %v1533
    %1535 = vdwg.mxu0
    %v1536 = vsel %vm132, %v1501, 0
    %1538 = vmatpush.msra.mxu0 0.0
    %1539 = vmatpush.msra.mxu0 0.0
    %1540 = vmatpush.msra.mxu0 0.0
    %1541 = vmatpush.msra.mxu0 0.0
    %1542 = vmatpush.msra.mxu0 0.0
    %1543 = vmatpush.msra.mxu0 0.0
    %1544 = vmatpush.msra.mxu0 0.0
    %1545 = vmatpush.msra.mxu0 0.0
    %1546 = vmatpush.msra.mxu0 0.0
    %1547 = vmatpush.msra.mxu0 0.0
    %1548 = vmatpush.msra.mxu0 0.0
    %1549 = vmatpush.msra.mxu0 0.0
    %1550 = vmatpush.msra.mxu0 %v1506
    %1551 = vmatpush.msra.mxu0 %v1505
    %1552 = vmatpush.msra.mxu0 %v1504
    %1553 = vmatpush.msra.mxu0 %v1503
    %1554 = vmatmul.f32.gmra.mxu0 %v1536
    %v1555 = vpop.f32.mrf.mxu0
    %v1556 = vadd.f32 %v1534, %v1555
    %1557 = vdwg.mxu0
    %s1558 = scalar_lea.vmem %s10, 64
    %v1559 = vld [vmem:[%s1558] sm:$0xff]
    %v1560 = vld [vmem:[%s1558 + $0x8] sm:$0xff]
    %v1561 = vld [vmem:[%s1558 + $0x10] sm:$0xff]
    %v1562 = vld [vmem:[%s1558 + $0x18] sm:$0xff]
    %v1563 = vrot.slane %v1501, 4
    %v1564 = vsel %vm132, %v1563, 0
    %1566 = vmatpush.msra.mxu0 0.0
    %1567 = vmatpush.msra.mxu0 0.0
    %1568 = vmatpush.msra.mxu0 0.0
    %1569 = vmatpush.msra.mxu0 0.0
    %1570 = vmatpush.msra.mxu0 0.0
    %1571 = vmatpush.msra.mxu0 0.0
    %1572 = vmatpush.msra.mxu0 0.0
    %1573 = vmatpush.msra.mxu0 0.0
    %1574 = vmatpush.msra.mxu0 0.0
    %1575 = vmatpush.msra.mxu0 0.0
    %1576 = vmatpush.msra.mxu0 0.0
    %1577 = vmatpush.msra.mxu0 0.0
    %1578 = vmatpush.msra.mxu0 %v1562
    %1579 = vmatpush.msra.mxu0 %v1561
    %1580 = vmatpush.msra.mxu0 %v1560
    %1581 = vmatpush.msra.mxu0 %v1559
    %1582 = vmatmul.f32.gmra.mxu0 %v1564
    %v1583 = vpop.f32.mrf.mxu0
    %v1584 = vadd.f32 0.0, %v1583
    %1585 = vdwg.mxu0
    %v1586 = vadd.f32 %v1556, %v1584
    %s1587 = scalar_lea.vmem %s10, 96
    %v1588 = vld [vmem:[%s1587] sm:$0xff]
    %v1589 = vld [vmem:[%s1587 + $0x8] sm:$0xff]
    %v1590 = vld [vmem:[%s1587 + $0x10] sm:$0xff]
    %v1591 = vld [vmem:[%s1587 + $0x18] sm:$0xff]
    %v1592 = vrot.slane %v1501, 6
    %v1593 = vsel %vm132, %v1592, 0
    %1595 = vmatpush.msra.mxu0 0.0
    %1596 = vmatpush.msra.mxu0 0.0
    %1597 = vmatpush.msra.mxu0 0.0
    %1598 = vmatpush.msra.mxu0 0.0
    %1599 = vmatpush.msra.mxu0 0.0
    %1600 = vmatpush.msra.mxu0 0.0
    %1601 = vmatpush.msra.mxu0 0.0
    %1602 = vmatpush.msra.mxu0 0.0
    %1603 = vmatpush.msra.mxu0 0.0
    %1604 = vmatpush.msra.mxu0 0.0
    %1605 = vmatpush.msra.mxu0 0.0
    %1606 = vmatpush.msra.mxu0 0.0
    %1607 = vmatpush.msra.mxu0 %v1591
    %1608 = vmatpush.msra.mxu0 %v1590
    %1609 = vmatpush.msra.mxu0 %v1589
    %1610 = vmatpush.msra.mxu0 %v1588
    %1611 = vmatmul.f32.gmra.mxu0 %v1593
    %v1612 = vpop.f32.mrf.mxu0
    %v1613 = vadd.f32 0.0, %v1612
    %1614 = vdwg.mxu0
    %v1615 = vadd.f32 %v1586, %v1613
    %s1616 = scalar_lea.vmem %s10, 128
    %v1617 = vld [vmem:[%s1616] sm:$0xff]
    %v1618 = vld [vmem:[%s1616 + $0x8] sm:$0xff]
    %v1619 = vld [vmem:[%s1616 + $0x10] sm:$0xff]
    %v1620 = vld [vmem:[%s1616 + $0x18] sm:$0xff]
    %v1622 = vsel %vm132, %v1502, 0
    %1624 = vmatpush.msra.mxu0 0.0
    %1625 = vmatpush.msra.mxu0 0.0
    %1626 = vmatpush.msra.mxu0 0.0
    %1627 = vmatpush.msra.mxu0 0.0
    %1628 = vmatpush.msra.mxu0 0.0
    %1629 = vmatpush.msra.mxu0 0.0
    %1630 = vmatpush.msra.mxu0 0.0
    %1631 = vmatpush.msra.mxu0 0.0
    %1632 = vmatpush.msra.mxu0 0.0
    %1633 = vmatpush.msra.mxu0 0.0
    %1634 = vmatpush.msra.mxu0 0.0
    %1635 = vmatpush.msra.mxu0 0.0
    %1636 = vmatpush.msra.mxu0 %v1620
    %1637 = vmatpush.msra.mxu0 %v1619
    %1638 = vmatpush.msra.mxu0 %v1618
    %1639 = vmatpush.msra.mxu0 %v1617
    %1640 = vmatmul.f32.gmra.mxu0 %v1622
    %v1641 = vpop.f32.mrf.mxu0
    %v1642 = vadd.f32 0.0, %v1641
    %1643 = vdwg.mxu0
    %v1644 = vadd.f32 %v1615, %v1642
    %s1645 = scalar_lea.vmem %s10, 160
    %v1646 = vld [vmem:[%s1645] sm:$0xff]
    %v1647 = vld [vmem:[%s1645 + $0x8] sm:$0xff]
    %v1648 = vld [vmem:[%s1645 + $0x10] sm:$0xff]
    %v1649 = vld [vmem:[%s1645 + $0x18] sm:$0xff]
    %v1650 = vrot.slane %v1502, 2
    %v1651 = vsel %vm132, %v1650, 0
    %1653 = vmatpush.msra.mxu0 0.0
    %1654 = vmatpush.msra.mxu0 0.0
    %1655 = vmatpush.msra.mxu0 0.0
    %1656 = vmatpush.msra.mxu0 0.0
    %1657 = vmatpush.msra.mxu0 0.0
    %1658 = vmatpush.msra.mxu0 0.0
    %1659 = vmatpush.msra.mxu0 0.0
    %1660 = vmatpush.msra.mxu0 0.0
    %1661 = vmatpush.msra.mxu0 0.0
    %1662 = vmatpush.msra.mxu0 0.0
    %1663 = vmatpush.msra.mxu0 0.0
    %1664 = vmatpush.msra.mxu0 0.0
    %1665 = vmatpush.msra.mxu0 %v1649
    %1666 = vmatpush.msra.mxu0 %v1648
    %1667 = vmatpush.msra.mxu0 %v1647
    %1668 = vmatpush.msra.mxu0 %v1646
    %1669 = vmatmul.f32.gmra.mxu0 %v1651
    %v1670 = vpop.f32.mrf.mxu0
    %v1671 = vadd.f32 0.0, %v1670
    %1672 = vdwg.mxu0
    %v1673 = vadd.f32 %v1644, %v1671
    %s1674 = scalar_lea.vmem %s10, 192
    %v1675 = vld [vmem:[%s1674] sm:$0xff]
    %v1676 = vld [vmem:[%s1674 + $0x8] sm:$0xff]
    %v1677 = vld [vmem:[%s1674 + $0x10] sm:$0xff]
    %v1678 = vld [vmem:[%s1674 + $0x18] sm:$0xff]
    %v1679 = vrot.slane %v1502, 4
    %v1680 = vsel %vm132, %v1679, 0
    %1682 = vmatpush.msra.mxu0 0.0
    %1683 = vmatpush.msra.mxu0 0.0
    %1684 = vmatpush.msra.mxu0 0.0
    %1685 = vmatpush.msra.mxu0 0.0
    %1686 = vmatpush.msra.mxu0 0.0
    %1687 = vmatpush.msra.mxu0 0.0
    %1688 = vmatpush.msra.mxu0 0.0
    %1689 = vmatpush.msra.mxu0 0.0
    %1690 = vmatpush.msra.mxu0 0.0
    %1691 = vmatpush.msra.mxu0 0.0
    %1692 = vmatpush.msra.mxu0 0.0
    %1693 = vmatpush.msra.mxu0 0.0
    %1694 = vmatpush.msra.mxu0 %v1678
    %1695 = vmatpush.msra.mxu0 %v1677
    %1696 = vmatpush.msra.mxu0 %v1676
    %1697 = vmatpush.msra.mxu0 %v1675
    %1698 = vmatmul.f32.gmra.mxu0 %v1680
    %v1699 = vpop.f32.mrf.mxu0
    %v1700 = vadd.f32 0.0, %v1699
    %1701 = vdwg.mxu0
    %v1702 = vadd.f32 %v1673, %v1700
    %s1703 = scalar_lea.vmem %s10, 224
    %v1704 = vld [vmem:[%s1703] sm:$0xff]
    %v1705 = vld [vmem:[%s1703 + $0x8] sm:$0xff]
    %v1706 = vld [vmem:[%s1703 + $0x10] sm:$0xff]
    %v1707 = vld [vmem:[%s1703 + $0x18] sm:$0xff]
    %v1708 = vrot.slane %v1502, 6
    %v1709 = vsel %vm132, %v1708, 0
    %1711 = vmatpush.msra.mxu0 0.0
    %1712 = vmatpush.msra.mxu0 0.0
    %1713 = vmatpush.msra.mxu0 0.0
    %1714 = vmatpush.msra.mxu0 0.0
    %1715 = vmatpush.msra.mxu0 0.0
    %1716 = vmatpush.msra.mxu0 0.0
    %1717 = vmatpush.msra.mxu0 0.0
    %1718 = vmatpush.msra.mxu0 0.0
    %1719 = vmatpush.msra.mxu0 0.0
    %1720 = vmatpush.msra.mxu0 0.0
    %1721 = vmatpush.msra.mxu0 0.0
    %1722 = vmatpush.msra.mxu0 0.0
    %1723 = vmatpush.msra.mxu0 %v1707
    %1724 = vmatpush.msra.mxu0 %v1706
    %1725 = vmatpush.msra.mxu0 %v1705
    %1726 = vmatpush.msra.mxu0 %v1704
    %1727 = vmatmul.f32.gmra.mxu0 %v1709
    %v1728 = vpop.f32.mrf.mxu0
    %v1729 = vadd.f32 0.0, %v1728
    %1730 = vdwg.mxu0
    %v1731 = vadd.f32 %v1702, %v1729
    %v1732 = vld [vmem:[%s11] sm:$0x1]
    %v1734 = vperm.slane %v1732, 0
    %v1736 = vadd.f32 %v1731, %v1734
    %vm1737 = vcmask 1041408
    %v1738 = vsel %vm1737, %v1736, -inf
    %1739 = vmax.xlane.f32.xlu0 %v1738
    %v1740 = vpop.xlane.xlu0 %1739
    %v1741 = vsub.f32 %v1736, %v1740
    %v1742 = vmul.f32 %v1741, 1.442695
    %v1743 = vpow.pop %v1742
    %v1744 = vsel %vm1737, %v1743, 0.0
    %1745 = vadd.xlane.f32.xlu0 %v1744
    %v1746 = vpop.xlane.xlu0 %1745
    %v1747 = vlog2.pop %v1746
    %v1748 = vmul.f32 %v1747, 0.6931472
    %v1749 = vsub.f32 %v1741, %v1748
    %1750 = vst [vmem:[#allocation2] sm:$0x3] %v1749
    // Predicated region
    $region50: #{forward.1} parent=1 // pred_check
      _
    $region51: #{forward.1} parent=1 // pred_check_branch
      %1752 = sbr.rel (0) target = $region53
    $region52: #{forward.1} parent=1 // pred_region
      %1754 = vsyncadd [#allocation3], 0
      %s1756 = sshll.u32 [#allocation2], 4
      %s1757 = int_to_ptr.vmem [resolvable:$true] %s1756
      %s1758 = sshll.u32 %s12, 4
      %s1759 = int_to_ptr.hbm [resolvable:$true] %s1758
      %1761 = dma.vmem_to_hbm [thread:$0]  %s1757, 32, %s1759, [#allocation3]
    $region53: #{forward.1} parent=1 // pred_fallthru
      _
    // Predicated region
    $region54: #{forward.1} parent=1 // pred_check
      _
    $region55: #{forward.1} parent=1 // pred_check_branch
      %1763 = sbr.rel (0) target = $region57
    $region56: #{forward.1} parent=1 // pred_region
      %1765 = dma.done [#allocation3], 32
    $region57: #{forward.1} parent=1 // pred_fallthru
      _
    %1766 = vsyncpa [#allocation3], 1

</llo_original>
